<compile_context>
chip_gen: v7x
topology: tpu7x:2x2x1
jax: 0.10.0
libtpu: 0.0.40
codegen_flags: <defaults>
</compile_context>

<pallas_src>
import functools
import numpy as np
import jax
import jax.numpy as jnp
from jax import lax
from jax.experimental import pallas as pl
from jax.experimental.pallas import tpu as pltpu

_VMEM_LIMIT_BYTES = 32 * 1024 * 1024


def _round_up(x, m):
    return ((x + m - 1) // m) * m


# ---------------------------------------------------------------------------
# Kernel: one (row-tile i, frame-chunk j) grid step.
# ---------------------------------------------------------------------------
def _decoder_kernel(x_ref, wpool_ref, wola_ref, o_ref, *, fc):
    # x_ref    : (tm, fc, L*S)  input slab, lane-dense minor dim (L*S)
    # wpool_ref: (L*S, S)       pooling matrix  (1/L on the s-diagonal), loaded once
    # wola_ref : (fc, S, Tp)    0/1 overlap-and-add scatter matrix for this frame chunk
    # o_ref    : (tm, Tp)       lane-dense output tile, resident across the j axis
    j = pl.program_id(1)

    @pl.when(j == 0)
    def _init():
        o_ref[...] = jnp.zeros_like(o_ref)

    wpool = wpool_ref[...]
    acc = None
    for fl in range(fc):                       # static, small (fc <= 8 in the common case)
        x2d = x_ref[:, fl, :]                  # (tm, L*S) -- sublane-row slice, no relayout
        # AvgPool2d((1, L)) after the transpose == mean over l; MXU contraction over lanes.
        pooled = jnp.dot(x2d, wpool, preferred_element_type=jnp.float32)       # (tm, S)
        # overlap_and_add: frame f goes to t = s*H + f; done as a 0/1 scatter matmul.
        contrib = jnp.dot(pooled, wola_ref[fl], preferred_element_type=jnp.float32)
        acc = contrib if acc is None else acc + contrib
    o_ref[...] += acc                          # single full-width (unmasked) RMW per step


# ---------------------------------------------------------------------------
# Wrapper: JAX/Pallas equivalent of Decoder(L).forward(est_source).
# ---------------------------------------------------------------------------
def decoder_forward(est_source, L, *, vmem_budget_bytes=24 * 1024 * 1024):
    """est_source: [B, C, K, S] -> [B, C, T],  T = (L//2)*(S-1) + K//L."""
    B, C, K, S = est_source.shape
    F = K // L                      # frame_length after AvgPool2d((1, L))
    H = L // 2                      # frame_step for overlap_and_add
    T = H * (S - 1) + F             # output_size
    M = B * C
    Q = L * S

    if K != F * L:
        # TODO(synk): avoid this copy by cropping via the BlockSpec index_map.
        est_source = est_source[:, :, :F * L, :]
    A = est_source.reshape(M, F, Q)             # free, row-major-compatible reshape

    # Frame-chunk size: a multiple of 8 (or the full F) so frame chunks never go ragged
    # (ragged frame chunks would mix garbage into valid output rows).
    fc = 8 if (F > 8 and F % 8 == 0) else F
    nj = F // fc

    Tp = _round_up(T, 128)                      # lane-dense output rows

    # Constant matrices (tiny next to the input; built once on device).
    wpool = jnp.tile(jnp.eye(S, dtype=jnp.float32), (L, 1)) / float(L)     # (L*S, S)
    f_idx = lax.broadcasted_iota(jnp.int32, (F, S, Tp), 0)
    s_idx = lax.broadcasted_iota(jnp.int32, (F, S, Tp), 1)
    t_idx = lax.broadcasted_iota(jnp.int32, (F, S, Tp), 2)
    wola = (t_idx == s_idx * H + f_idx).astype(jnp.float32)                # (F, S, Tp)

    # ---- row-tile size: fill (but do not bust) the VMEM budget ----------------------
    esz = est_source.dtype.itemsize
    fixed = 2 * (fc * S * Tp * 4) + 2 * (Q * S * 4)        # wola + wpool (double-buffered)
    per_row = 2 * (fc * Q * esz) + 2 * (Tp * 4)            # input + output blocks, per row
    tm_budget = max(8, (vmem_budget_bytes - fixed) // per_row)
    if M <= 8:
        tm = M                                             # block == full row dim
    else:
        half = _round_up((M + 1) // 2, 8)                  # >= 2 row tiles for v7x megacore
        tm = max(8, min((tm_budget // 8) * 8, half))
    ni = pl.cdiv(M, tm)
    Mp = ni * tm                                           # padded logical output rows

    kernel = functools.partial(_decoder_kernel, fc=fc)

    out = pl.pallas_call(
        kernel,
        out_shape=jax.ShapeDtypeStruct((Mp, Tp), jnp.float32),
        grid_spec=pltpu.PrefetchScalarGridSpec(
            num_scalar_prefetch=0,
            grid=(ni, nj),                                  # j (frames) is innermost
            in_specs=[
                pl.BlockSpec((tm, fc, Q), lambda i, j: (i, j, 0)),   # input slab
                pl.BlockSpec((Q, S), lambda i, j: (0, 0)),           # pooling matrix
                pl.BlockSpec((fc, S, Tp), lambda i, j: (j, 0, 0)),   # OLA scatter matrix
            ],
            out_specs=pl.BlockSpec((tm, Tp), lambda i, j: (i, 0)),   # resident across j
        ),
        compiler_params=pltpu.CompilerParams(
            dimension_semantics=("parallel", "arbitrary"),
            vmem_limit_bytes=_VMEM_LIMIT_BYTES,
        ),
    )(A, wpool, wola)

    # Garbage rows (>= M, from the ragged last row tile) and padded columns are sliced off.
    return out[:M, :T].reshape(B, C, T).astype(est_source.dtype)


# ---------------------------------------------------------------------------
# Pure-JAX reference (mirrors the PyTorch forward) for the correctness check.
# ---------------------------------------------------------------------------
def decoder_reference(est_source, L):
    B, C, K, S = est_source.shape
    x = jnp.transpose(est_source, (0, 1, 3, 2))                    # [B, C, S, K]
    F = K // L
    pooled = x[..., :F * L].reshape(B, C, S, F, L).mean(axis=-1)   # AvgPool2d((1, L))
    H = L // 2
    T = H * (S - 1) + F
    out = jnp.zeros((B, C, T), jnp.float32)
    for s in range(S):                                             # overlap_and_add
        out = out.at[:, :, s * H:s * H + F].add(pooled[:, :, s, :])
    return out


if __name__ == "__main__":
    key = jax.random.PRNGKey(0)
    k1, k2 = jax.random.split(key)

    # Tolerance sized for MXU matmul (bf16 multi-pass) accumulation of f32 data.
    RTOL, ATOL = 5e-3, 5e-3

    # Test 1: small shapes consistent with the module (est_source [B, C, K, S], L | K).
    L = 8
    B, C, K, S = 2, 2, 64, 8
    x1 = jax.random.normal(k1, (B, C, K, S), dtype=jnp.float32)
    out1 = jax.block_until_ready(decoder_forward(x1, L))
    ref1 = decoder_reference(x1, L)
    assert out1.shape == ref1.shape == (B, C, (L // 2) * (S - 1) + K // L)
    np.testing.assert_allclose(np.asarray(out1), np.asarray(ref1), rtol=RTOL, atol=ATOL)

    # Test 2: exercises multiple row tiles (ragged last tile) and the frame-chunk grid axis.
    B, C, K, S = 3, 4, 128, 16
    x2 = jax.random.normal(k2, (B, C, K, S), dtype=jnp.float32)
    out2 = jax.block_until_ready(decoder_forward(x2, L))
    ref2 = decoder_reference(x2, L)
    assert out2.shape == ref2.shape == (B, C, (L // 2) * (S - 1) + K // L)
    np.testing.assert_allclose(np.asarray(out2), np.asarray(ref2), rtol=RTOL, atol=ATOL)

    print("KERNEL_OK")
</pallas_src>

<mosaic_0001>
module attributes {stable_mosaic.version = 11 : i64} {
  func.func @_decoder_kernel(%arg0: i32, %arg1: i32, %arg2: memref<4x8x64xf32, #tpu.memory_space<vmem>>, %arg3: memref<64x8xf32, #tpu.memory_space<vmem>>, %arg4: memref<8x8x128xf32, #tpu.memory_space<vmem>>, %arg5: memref<4x128xf32, #tpu.memory_space<vmem>>) attributes {dimension_semantics = [#tpu.dimension_semantics<parallel>, #tpu.dimension_semantics<arbitrary>], iteration_bounds = array<i64: 1, 1>, scalar_prefetch = 0 : i64, scratch_operands = 0 : i64, tpu.core_type = #tpu.core_type<tc>, window_params = [{transform_indices = @transform_0, window_bounds = array<i64: 4, 8, 64>}, {pipeline_mode = #tpu.pipeline_mode<synchronous>, transform_indices = @transform_1, window_bounds = array<i64: 64, 8>}, {transform_indices = @transform_2, window_bounds = array<i64: 8, 8, 128>}, {transform_indices = @transform_3, window_bounds = array<i64: 4, 128>}]} {
    %c0_i32 = arith.constant 0 : i32
    %0 = arith.cmpi eq, %arg1, %c0_i32 : i32
    %1 = arith.extui %0 : i1 to i32
    %c0_i32_0 = arith.constant 0 : i32
    %2 = arith.cmpi ne, %1, %c0_i32_0 : i32
    scf.if %2 {
      %cst_62 = arith.constant 0.000000e+00 : f32
      %62 = vector.broadcast %cst_62 : f32 to vector<4x128xf32>
      %c0_63 = arith.constant 0 : index
      %c0_64 = arith.constant 0 : index
      %63 = vector.load %arg5[%c0_63, %c0_64] : memref<4x128xf32, #tpu.memory_space<vmem>>, vector<4x128xf32>
      tpu.vector_store %arg5[%c0_63, %c0_64], %62 {strides = array<i32>} : memref<4x128xf32, #tpu.memory_space<vmem>>, vector<4x128xf32>,
    } else {
    }
    %c0 = arith.constant 0 : index
    %c0_1 = arith.constant 0 : index
    %3 = vector.load %arg3[%c0, %c0_1] : memref<64x8xf32, #tpu.memory_space<vmem>>, vector<64x8xf32>
    %c0_2 = arith.constant 0 : index
    %c0_3 = arith.constant 0 : index
    %c0_4 = arith.constant 0 : index
    %4 = vector.load %arg2[%c0_2, %c0_3, %c0_4] : memref<4x8x64xf32, #tpu.memory_space<vmem>>, vector<4x1x64xf32>
    %5 = vector.shape_cast %4 : vector<4x1x64xf32> to vector<4x64xf32>
    %cst = arith.constant dense<0.000000e+00> : vector<4x8xf32>
    %6 = tpu.matmul %5, %3, %cst {dimension_numbers = #tpu.dot_dimension_numbers<[1], [0], [0], [1], [0, 0, 1, 1], [], []>} : vector<4x64xf32>, vector<64x8xf32>, vector<4x8xf32> -> vector<4x8xf32>
    %c0_5 = arith.constant 0 : index
    %c0_6 = arith.constant 0 : index
    %c0_7 = arith.constant 0 : index
    %7 = vector.load %arg4[%c0_5, %c0_6, %c0_7] : memref<8x8x128xf32, #tpu.memory_space<vmem>>, vector<1x8x128xf32>
    %8 = vector.shape_cast %7 : vector<1x8x128xf32> to vector<8x128xf32>
    %cst_8 = arith.constant dense<0.000000e+00> : vector<4x128xf32>
    %9 = tpu.matmul %6, %8, %cst_8 {dimension_numbers = #tpu.dot_dimension_numbers<[1], [0], [0], [1], [0, 0, 1, 1], [], []>} : vector<4x8xf32>, vector<8x128xf32>, vector<4x128xf32> -> vector<4x128xf32>
    %c0_9 = arith.constant 0 : index
    %c1 = arith.constant 1 : index
    %c0_10 = arith.constant 0 : index
    %10 = vector.load %arg2[%c0_9, %c1, %c0_10] : memref<4x8x64xf32, #tpu.memory_space<vmem>>, vector<4x1x64xf32>
    %11 = vector.shape_cast %10 : vector<4x1x64xf32> to vector<4x64xf32>
    %cst_11 = arith.constant dense<0.000000e+00> : vector<4x8xf32>
    %12 = tpu.matmul %11, %3, %cst_11 {dimension_numbers = #tpu.dot_dimension_numbers<[1], [0], [0], [1], [0, 0, 1, 1], [], []>} : vector<4x64xf32>, vector<64x8xf32>, vector<4x8xf32> -> vector<4x8xf32>
    %c1_12 = arith.constant 1 : index
    %c0_13 = arith.constant 0 : index
    %c0_14 = arith.constant 0 : index
    %13 = vector.load %arg4[%c1_12, %c0_13, %c0_14] : memref<8x8x128xf32, #tpu.memory_space<vmem>>, vector<1x8x128xf32>
    %14 = vector.shape_cast %13 : vector<1x8x128xf32> to vector<8x128xf32>
    %cst_15 = arith.constant dense<0.000000e+00> : vector<4x128xf32>
    %15 = tpu.matmul %12, %14, %cst_15 {dimension_numbers = #tpu.dot_dimension_numbers<[1], [0], [0], [1], [0, 0, 1, 1], [], []>} : vector<4x8xf32>, vector<8x128xf32>, vector<4x128xf32> -> vector<4x128xf32>
    %16 = arith.addf %9, %15 : vector<4x128xf32>
    %c0_16 = arith.constant 0 : index
    %c2 = arith.constant 2 : index
    %c0_17 = arith.constant 0 : index
    %17 = vector.load %arg2[%c0_16, %c2, %c0_17] : memref<4x8x64xf32, #tpu.memory_space<vmem>>, vector<4x1x64xf32>
    %18 = vector.shape_cast %17 : vector<4x1x64xf32> to vector<4x64xf32>
    %cst_18 = arith.constant dense<0.000000e+00> : vector<4x8xf32>
    %19 = tpu.matmul %18, %3, %cst_18 {dimension_numbers = #tpu.dot_dimension_numbers<[1], [0], [0], [1], [0, 0, 1, 1], [], []>} : vector<4x64xf32>, vector<64x8xf32>, vector<4x8xf32> -> vector<4x8xf32>
    %c2_19 = arith.constant 2 : index
    %c0_20 = arith.constant 0 : index
    %c0_21 = arith.constant 0 : index
    %20 = vector.load %arg4[%c2_19, %c0_20, %c0_21] : memref<8x8x128xf32, #tpu.memory_space<vmem>>, vector<1x8x128xf32>
    %21 = vector.shape_cast %20 : vector<1x8x128xf32> to vector<8x128xf32>
    %cst_22 = arith.constant dense<0.000000e+00> : vector<4x128xf32>
    %22 = tpu.matmul %19, %21, %cst_22 {dimension_numbers = #tpu.dot_dimension_numbers<[1], [0], [0], [1], [0, 0, 1, 1], [], []>} : vector<4x8xf32>, vector<8x128xf32>, vector<4x128xf32> -> vector<4x128xf32>
    %23 = arith.addf %16, %22 : vector<4x128xf32>
    %c0_23 = arith.constant 0 : index
    %c3 = arith.constant 3 : index
    %c0_24 = arith.constant 0 : index
    %24 = vector.load %arg2[%c0_23, %c3, %c0_24] : memref<4x8x64xf32, #tpu.memory_space<vmem>>, vector<4x1x64xf32>
    %25 = vector.shape_cast %24 : vector<4x1x64xf32> to vector<4x64xf32>
    %cst_25 = arith.constant dense<0.000000e+00> : vector<4x8xf32>
    %26 = tpu.matmul %25, %3, %cst_25 {dimension_numbers = #tpu.dot_dimension_numbers<[1], [0], [0], [1], [0, 0, 1, 1], [], []>} : vector<4x64xf32>, vector<64x8xf32>, vector<4x8xf32> -> vector<4x8xf32>
    %c3_26 = arith.constant 3 : index
    %c0_27 = arith.constant 0 : index
    %c0_28 = arith.constant 0 : index
    %27 = vector.load %arg4[%c3_26, %c0_27, %c0_28] : memref<8x8x128xf32, #tpu.memory_space<vmem>>, vector<1x8x128xf32>
    %28 = vector.shape_cast %27 : vector<1x8x128xf32> to vector<8x128xf32>
    %cst_29 = arith.constant dense<0.000000e+00> : vector<4x128xf32>
    %29 = tpu.matmul %26, %28, %cst_29 {dimension_numbers = #tpu.dot_dimension_numbers<[1], [0], [0], [1], [0, 0, 1, 1], [], []>} : vector<4x8xf32>, vector<8x128xf32>, vector<4x128xf32> -> vector<4x128xf32>
    %30 = arith.addf %23, %29 : vector<4x128xf32>
    %c0_30 = arith.constant 0 : index
    %c4 = arith.constant 4 : index
    %c0_31 = arith.constant 0 : index
    %31 = vector.load %arg2[%c0_30, %c4, %c0_31] : memref<4x8x64xf32, #tpu.memory_space<vmem>>, vector<4x1x64xf32>
    %32 = vector.shape_cast %31 : vector<4x1x64xf32> to vector<4x64xf32>
    %cst_32 = arith.constant dense<0.000000e+00> : vector<4x8xf32>
    %33 = tpu.matmul %32, %3, %cst_32 {dimension_numbers = #tpu.dot_dimension_numbers<[1], [0], [0], [1], [0, 0, 1, 1], [], []>} : vector<4x64xf32>, vector<64x8xf32>, vector<4x8xf32> -> vector<4x8xf32>
    %c4_33 = arith.constant 4 : index
    %c0_34 = arith.constant 0 : index
    %c0_35 = arith.constant 0 : index
    %34 = vector.load %arg4[%c4_33, %c0_34, %c0_35] : memref<8x8x128xf32, #tpu.memory_space<vmem>>, vector<1x8x128xf32>
    %35 = vector.shape_cast %34 : vector<1x8x128xf32> to vector<8x128xf32>
    %cst_36 = arith.constant dense<0.000000e+00> : vector<4x128xf32>
    %36 = tpu.matmul %33, %35, %cst_36 {dimension_numbers = #tpu.dot_dimension_numbers<[1], [0], [0], [1], [0, 0, 1, 1], [], []>} : vector<4x8xf32>, vector<8x128xf32>, vector<4x128xf32> -> vector<4x128xf32>
    %37 = arith.addf %30, %36 : vector<4x128xf32>
    %c0_37 = arith.constant 0 : index
    %c5 = arith.constant 5 : index
    %c0_38 = arith.constant 0 : index
    %38 = vector.load %arg2[%c0_37, %c5, %c0_38] : memref<4x8x64xf32, #tpu.memory_space<vmem>>, vector<4x1x64xf32>
    %39 = vector.shape_cast %38 : vector<4x1x64xf32> to vector<4x64xf32>
    %cst_39 = arith.constant dense<0.000000e+00> : vector<4x8xf32>
    %40 = tpu.matmul %39, %3, %cst_39 {dimension_numbers = #tpu.dot_dimension_numbers<[1], [0], [0], [1], [0, 0, 1, 1], [], []>} : vector<4x64xf32>, vector<64x8xf32>, vector<4x8xf32> -> vector<4x8xf32>
    %c5_40 = arith.constant 5 : index
    %c0_41 = arith.constant 0 : index
    %c0_42 = arith.constant 0 : index
    %41 = vector.load %arg4[%c5_40, %c0_41, %c0_42] : memref<8x8x128xf32, #tpu.memory_space<vmem>>, vector<1x8x128xf32>
    %42 = vector.shape_cast %41 : vector<1x8x128xf32> to vector<8x128xf32>
    %cst_43 = arith.constant dense<0.000000e+00> : vector<4x128xf32>
    %43 = tpu.matmul %40, %42, %cst_43 {dimension_numbers = #tpu.dot_dimension_numbers<[1], [0], [0], [1], [0, 0, 1, 1], [], []>} : vector<4x8xf32>, vector<8x128xf32>, vector<4x128xf32> -> vector<4x128xf32>
    %44 = arith.addf %37, %43 : vector<4x128xf32>
    %c0_44 = arith.constant 0 : index
    %c6 = arith.constant 6 : index
    %c0_45 = arith.constant 0 : index
    %45 = vector.load %arg2[%c0_44, %c6, %c0_45] : memref<4x8x64xf32, #tpu.memory_space<vmem>>, vector<4x1x64xf32>
    %46 = vector.shape_cast %45 : vector<4x1x64xf32> to vector<4x64xf32>
    %cst_46 = arith.constant dense<0.000000e+00> : vector<4x8xf32>
    %47 = tpu.matmul %46, %3, %cst_46 {dimension_numbers = #tpu.dot_dimension_numbers<[1], [0], [0], [1], [0, 0, 1, 1], [], []>} : vector<4x64xf32>, vector<64x8xf32>, vector<4x8xf32> -> vector<4x8xf32>
    %c6_47 = arith.constant 6 : index
    %c0_48 = arith.constant 0 : index
    %c0_49 = arith.constant 0 : index
    %48 = vector.load %arg4[%c6_47, %c0_48, %c0_49] : memref<8x8x128xf32, #tpu.memory_space<vmem>>, vector<1x8x128xf32>
    %49 = vector.shape_cast %48 : vector<1x8x128xf32> to vector<8x128xf32>
    %cst_50 = arith.constant dense<0.000000e+00> : vector<4x128xf32>
    %50 = tpu.matmul %47, %49, %cst_50 {dimension_numbers = #tpu.dot_dimension_numbers<[1], [0], [0], [1], [0, 0, 1, 1], [], []>} : vector<4x8xf32>, vector<8x128xf32>, vector<4x128xf32> -> vector<4x128xf32>
    %51 = arith.addf %44, %50 : vector<4x128xf32>
    %c0_51 = arith.constant 0 : index
    %c7 = arith.constant 7 : index
    %c0_52 = arith.constant 0 : index
    %52 = vector.load %arg2[%c0_51, %c7, %c0_52] : memref<4x8x64xf32, #tpu.memory_space<vmem>>, vector<4x1x64xf32>
    %53 = vector.shape_cast %52 : vector<4x1x64xf32> to vector<4x64xf32>
    %cst_53 = arith.constant dense<0.000000e+00> : vector<4x8xf32>
    %54 = tpu.matmul %53, %3, %cst_53 {dimension_numbers = #tpu.dot_dimension_numbers<[1], [0], [0], [1], [0, 0, 1, 1], [], []>} : vector<4x64xf32>, vector<64x8xf32>, vector<4x8xf32> -> vector<4x8xf32>
    %c7_54 = arith.constant 7 : index
    %c0_55 = arith.constant 0 : index
    %c0_56 = arith.constant 0 : index
    %55 = vector.load %arg4[%c7_54, %c0_55, %c0_56] : memref<8x8x128xf32, #tpu.memory_space<vmem>>, vector<1x8x128xf32>
    %56 = vector.shape_cast %55 : vector<1x8x128xf32> to vector<8x128xf32>
    %cst_57 = arith.constant dense<0.000000e+00> : vector<4x128xf32>
    %57 = tpu.matmul %54, %56, %cst_57 {dimension_numbers = #tpu.dot_dimension_numbers<[1], [0], [0], [1], [0, 0, 1, 1], [], []>} : vector<4x8xf32>, vector<8x128xf32>, vector<4x128xf32> -> vector<4x128xf32>
    %58 = arith.addf %51, %57 : vector<4x128xf32>
    %c0_58 = arith.constant 0 : index
    %c0_59 = arith.constant 0 : index
    %59 = vector.load %arg5[%c0_58, %c0_59] : memref<4x128xf32, #tpu.memory_space<vmem>>, vector<4x128xf32>
    %60 = arith.addf %59, %58 : vector<4x128xf32>
    %c0_60 = arith.constant 0 : index
    %c0_61 = arith.constant 0 : index
    %61 = vector.load %arg5[%c0_60, %c0_61] : memref<4x128xf32, #tpu.memory_space<vmem>>, vector<4x128xf32>
    tpu.vector_store %arg5[%c0_60, %c0_61], %60 {strides = array<i32>} : memref<4x128xf32, #tpu.memory_space<vmem>>, vector<4x128xf32>,
    return
  }
  func.func @transform_0(%arg0: i32, %arg1: i32) -> (i32, i32, i32) {
    %c0_i32 = arith.constant 0 : i32
    %c0_i32_0 = arith.constant 0 : i32
    return %arg0, %arg1, %c0_i32 : i32, i32, i32
  }
  func.func @transform_1(%arg0: i32, %arg1: i32) -> (i32, i32) {
    %c0_i32 = arith.constant 0 : i32
    %c0_i32_0 = arith.constant 0 : i32
    %c0_i32_1 = arith.constant 0 : i32
    return %c0_i32, %c0_i32_0 : i32, i32
  }
  func.func @transform_2(%arg0: i32, %arg1: i32) -> (i32, i32, i32) {
    %c0_i32 = arith.constant 0 : i32
    %c0_i32_0 = arith.constant 0 : i32
    %c0_i32_1 = arith.constant 0 : i32
    return %arg1, %c0_i32, %c0_i32_0 : i32, i32, i32
  }
  func.func @transform_3(%arg0: i32, %arg1: i32) -> (i32, i32) {
    %c0_i32 = arith.constant 0 : i32
    %c0_i32_0 = arith.constant 0 : i32
    return %arg0, %c0_i32 : i32, i32
  }
}

</mosaic_0001>

<llo_original>
// kernel: tpu_custom_call.1
$region0: #{tpu_custom_call.1}
  #allocation0 [shape = 'u32[]', space=smem, size = 0x4, offset = 0x4, fixed_abs, tag = 'smem constant byte address 0x4 - core index']
  #allocation1 [shape = 'u32[144,128]{1,0:T(1,128)}', space=vmem, size = 0x12000, scoped, tag = 'internal scratch']
  %s0 = inlined_call_operand.hbm [shape: f32[4,8,64], index: 0, kind: input, shape index: {}]
  %s1 = inlined_call_operand.vmem [shape: f32[64,8], index: 1, kind: input, shape index: {}]
  %s2 = inlined_call_operand.vmem [shape: f32[8,8,128], index: 2, kind: input, shape index: {}]
  %s3 = inlined_call_operand.hbm [shape: f32[4,128], index: 3, kind: output, shape index: {}]
  %s4 = sld [smem:[#allocation0]]
  $region30: #{tpu_custom_call.1} parent=0
    _
  %s6 = ssub.s32 1, %s4
  %s7 = scalar_select 0, %s6, %s4
  $region1: #{tpu_custom_call.1} parent=0
    #allocation2 [shape = 'u8[16384]{0}', space=vmem, size = 0x4000, scoped, tag = 'input window, operand 0, single buffered']
    #allocation3 [shape = 's32[1]{0}', space=sflag, size = 0x4, scoped, tag = 'scoped memory for tpu_custom_call.1']
    #allocation4 [shape = 's32[1]{0}', space=sflag, size = 0x4, scoped, tag = 'scoped memory for tpu_custom_call.1']
    #allocation5 [shape = 'u8[2048]{0}', space=vmem, size = 0x800, scoped, tag = 'output window, operand 0, single buffered']
    %8 = vsyncpa [#allocation3], 0
    %9 = vsyncpa [#allocation4], 0
    // Predicated region
    $region2: #{tpu_custom_call.1} parent=1 // pred_check
      _
    $region3: #{tpu_custom_call.1} parent=1 // pred_check_branch
      %11 = sbr.rel (0) target = $region5
    $region4: #{tpu_custom_call.1} parent=1 // pred_region
      %s13 = ssub.s32 512, 512
      %14 = vsyncadd [#allocation3], %s13
      %s15 = sshll.u32 [#allocation2], 4
      %s16 = int_to_ptr.vmem [resolvable:$true] %s15
      %21 = dma.hbm_to_vmem [thread:$0]  %s0, 512, %s16, [#allocation3], 128, 128, 8
    $region5: #{tpu_custom_call.1} parent=1 // pred_fallthru
      _
    // Predicated region
    $region6: #{tpu_custom_call.1} parent=1 // pred_check
      _
    $region7: #{tpu_custom_call.1} parent=1 // pred_check_branch
      %23 = sbr.rel (0) target = $region9
    $region8: #{tpu_custom_call.1} parent=1 // pred_region
      _
    $region9: #{tpu_custom_call.1} parent=1 // pred_fallthru
      _
    // Predicated region
    $region10: #{tpu_custom_call.1} parent=1 // pred_check
      _
    $region11: #{tpu_custom_call.1} parent=1 // pred_check_branch
      %25 = sbr.rel (0) target = $region13
    $region12: #{tpu_custom_call.1} parent=1 // pred_region
      _
    $region13: #{tpu_custom_call.1} parent=1 // pred_fallthru
      _
    // Predicated region
    $region14: #{tpu_custom_call.1} parent=1 // pred_check
      _
    $region15: #{tpu_custom_call.1} parent=1 // pred_check_branch
      %27 = sbr.rel (0) target = $region17
    $region16: #{tpu_custom_call.1} parent=1 // pred_region
      %28 = dma.done [#allocation3], 512
    $region17: #{tpu_custom_call.1} parent=1 // pred_fallthru
      _
    %p29 = scmp.eq.s32.totalorder 0, 0
    // Predicated region
    $region18: #{tpu_custom_call.1} parent=1 // pred_check
      %p30 = pneg %p29
    $region19: #{tpu_custom_call.1} parent=1 // pred_check_branch
      %32 = sbr.rel (%p30) target = $region21
    $region20: #{tpu_custom_call.1} parent=1 // pred_region
      %33 = vst [vmem:[#allocation5] sm:$0xf] 0.0
    $region21: #{tpu_custom_call.1} parent=1 // pred_fallthru
      _
    %v34 = vld [vmem:[%s1] sm:$0xff]
    %v35 = vld [vmem:[%s1 + $0x8] sm:$0xff]
    %v36 = vld [vmem:[%s1 + $0x10] sm:$0xff]
    %v37 = vld [vmem:[%s1 + $0x18] sm:$0xff]
    %v38 = vld [vmem:[%s1 + $0x20] sm:$0xff]
    %v39 = vld [vmem:[%s1 + $0x28] sm:$0xff]
    %v40 = vld [vmem:[%s1 + $0x30] sm:$0xff]
    %v41 = vld [vmem:[%s1 + $0x38] sm:$0xff]
    %v42 = vld [vmem:[#allocation2] sm:$0x1]
    %v43 = vld [vmem:[#allocation2 + $0x8] sm:$0x1]
    %v44 = vld [vmem:[#allocation2 + $0x10] sm:$0x1]
    %v45 = vld [vmem:[#allocation2 + $0x18] sm:$0x1]
    %v50 = vrot.slane %v43, 7
    %vm51 = vcmask 1041409
    %v52 = vsel %vm51, %v50, %v42
    %v53 = vrot.slane %v44, 6
    %vm54 = vcmask 1042434
    %v55 = vsel %vm54, %v53, %v52
    %v56 = vrot.slane %v45, 5
    %vm57 = vcmask 1043459
    %v58 = vsel %vm57, %v56, %v55
    %vm59 = vcmask 523264
    %v60 = vsel %vm59, %v58, 0
    %62 = vmatprep.subr.mxu0 0.0
    %63 = vmatpush1.msra.mxu0 %v34
    %64 = vmatprep.subr.mxu0 0.0
    %65 = vmatpush1.msra.mxu0 %v35
    %66 = vmatprep.subr.mxu0 0.0
    %67 = vmatpush1.msra.mxu0 %v36
    %68 = vmatprep.subr.mxu0 0.0
    %69 = vmatpush1.msra.mxu0 %v37
    %70 = vmatprep.subr.mxu0 0.0
    %71 = vmatpush1.msra.mxu0 %v38
    %72 = vmatprep.subr.mxu0 0.0
    %73 = vmatpush1.msra.mxu0 %v39
    %74 = vmatprep.subr.mxu0 0.0
    %75 = vmatpush1.msra.mxu0 %v40
    %76 = vmatprep.subr.mxu0 0.0
    %77 = vmatpush1.msra.mxu0 %v41
    %78 = vmatprep.subr.mxu0 0.0
    %79 = vmatpush1.msra.mxu0 0.0
    %80 = vmatprep.subr.mxu0 0.0
    %81 = vmatpush1.msra.mxu0 0.0
    %82 = vmatprep.subr.mxu0 0.0
    %83 = vmatpush1.msra.mxu0 0.0
    %84 = vmatprep.subr.mxu0 0.0
    %85 = vmatpush1.msra.mxu0 0.0
    %86 = vmatprep.subr.mxu0 0.0
    %87 = vmatpush1.msra.mxu0 0.0
    %88 = vmatprep.subr.mxu0 0.0
    %89 = vmatpush1.msra.mxu0 0.0
    %90 = vmatprep.subr.mxu0 0.0
    %91 = vmatpush1.msra.mxu0 0.0
    %92 = vmatprep.subr.mxu0 0.0
    %93 = vmatpush1.msra.mxu0 0.0
    %94 = vmatprep.subr.mxu0 0.0
    %95 = vmatpush1.msra.mxu0 0.0
    %96 = vmatprep.subr.mxu0 0.0
    %97 = vmatpush1.msra.mxu0 0.0
    %98 = vmatprep.subr.mxu0 0.0
    %99 = vmatpush1.msra.mxu0 0.0
    %100 = vmatprep.subr.mxu0 0.0
    %101 = vmatpush1.msra.mxu0 0.0
    %102 = vmatprep.subr.mxu0 0.0
    %103 = vmatpush1.msra.mxu0 0.0
    %104 = vmatprep.subr.mxu0 0.0
    %105 = vmatpush1.msra.mxu0 0.0
    %106 = vmatprep.subr.mxu0 0.0
    %107 = vmatpush1.msra.mxu0 0.0
    %108 = vmatprep.subr.mxu0 0.0
    %109 = vmatpush1.msra.mxu0 0.0
    %110 = vmatprep.subr.mxu0 0.0
    %111 = vmatpush1.msra.mxu0 0.0
    %112 = vmatprep.subr.mxu0 0.0
    %113 = vmatpush1.msra.mxu0 0.0
    %114 = vmatprep.subr.mxu0 0.0
    %115 = vmatpush1.msra.mxu0 0.0
    %116 = vmatprep.subr.mxu0 0.0
    %117 = vmatpush1.msra.mxu0 0.0
    %118 = vmatprep.subr.mxu0 0.0
    %119 = vmatpush1.msra.mxu0 0.0
    %120 = vmatprep.subr.mxu0 0.0
    %121 = vmatpush1.msra.mxu0 0.0
    %122 = vmatprep.subr.mxu0 0.0
    %123 = vmatpush1.msra.mxu0 0.0
    %124 = vmatprep.subr.mxu0 0.0
    %125 = vmatpush1.msra.mxu0 0.0
    %126 = vmatprep.mubr.f32.mxu0 0.0
    %127 = vmatmul.mubr.f32.gmra.mrb[0].mxu0 %v60
    %v128 = vpop.f32.mrb[0].mxu0
    %v129 = vadd.f32 0.0, %v128
    %v130 = vpop.f32.mrb[0].mxu0
    %131 = vdwg.mxu0
    %v132 = vld [vmem:[%s2] sm:$0xff]
    %v133 = vld [vmem:[#allocation2 + $0x1] sm:$0x1]
    %v134 = vld [vmem:[#allocation2 + $0x9] sm:$0x1]
    %v135 = vld [vmem:[#allocation2 + $0x11] sm:$0x1]
    %v136 = vld [vmem:[#allocation2 + $0x19] sm:$0x1]
    %v141 = vrot.slane %v134, 7
    %v142 = vsel %vm51, %v141, %v133
    %v143 = vrot.slane %v135, 6
    %v144 = vsel %vm54, %v143, %v142
    %v145 = vrot.slane %v136, 5
    %v146 = vsel %vm57, %v145, %v144
    %v147 = vsel %vm59, %v146, 0
    %149 = vmatprep.subr.mxu0 0.0
    %150 = vmatpush1.msra.mxu0 %v34
    %151 = vmatprep.subr.mxu0 0.0
    %152 = vmatpush1.msra.mxu0 %v35
    %153 = vmatprep.subr.mxu0 0.0
    %154 = vmatpush1.msra.mxu0 %v36
    %155 = vmatprep.subr.mxu0 0.0
    %156 = vmatpush1.msra.mxu0 %v37
    %157 = vmatprep.subr.mxu0 0.0
    %158 = vmatpush1.msra.mxu0 %v38
    %159 = vmatprep.subr.mxu0 0.0
    %160 = vmatpush1.msra.mxu0 %v39
    %161 = vmatprep.subr.mxu0 0.0
    %162 = vmatpush1.msra.mxu0 %v40
    %163 = vmatprep.subr.mxu0 0.0
    %164 = vmatpush1.msra.mxu0 %v41
    %165 = vmatprep.subr.mxu0 0.0
    %166 = vmatpush1.msra.mxu0 0.0
    %167 = vmatprep.subr.mxu0 0.0
    %168 = vmatpush1.msra.mxu0 0.0
    %169 = vmatprep.subr.mxu0 0.0
    %170 = vmatpush1.msra.mxu0 0.0
    %171 = vmatprep.subr.mxu0 0.0
    %172 = vmatpush1.msra.mxu0 0.0
    %173 = vmatprep.subr.mxu0 0.0
    %174 = vmatpush1.msra.mxu0 0.0
    %175 = vmatprep.subr.mxu0 0.0
    %176 = vmatpush1.msra.mxu0 0.0
    %177 = vmatprep.subr.mxu0 0.0
    %178 = vmatpush1.msra.mxu0 0.0
    %179 = vmatprep.subr.mxu0 0.0
    %180 = vmatpush1.msra.mxu0 0.0
    %181 = vmatprep.subr.mxu0 0.0
    %182 = vmatpush1.msra.mxu0 0.0
    %183 = vmatprep.subr.mxu0 0.0
    %184 = vmatpush1.msra.mxu0 0.0
    %185 = vmatprep.subr.mxu0 0.0
    %186 = vmatpush1.msra.mxu0 0.0
    %187 = vmatprep.subr.mxu0 0.0
    %188 = vmatpush1.msra.mxu0 0.0
    %189 = vmatprep.subr.mxu0 0.0
    %190 = vmatpush1.msra.mxu0 0.0
    %191 = vmatprep.subr.mxu0 0.0
    %192 = vmatpush1.msra.mxu0 0.0
    %193 = vmatprep.subr.mxu0 0.0
    %194 = vmatpush1.msra.mxu0 0.0
    %195 = vmatprep.subr.mxu0 0.0
    %196 = vmatpush1.msra.mxu0 0.0
    %197 = vmatprep.subr.mxu0 0.0
    %198 = vmatpush1.msra.mxu0 0.0
    %199 = vmatprep.subr.mxu0 0.0
    %200 = vmatpush1.msra.mxu0 0.0
    %201 = vmatprep.subr.mxu0 0.0
    %202 = vmatpush1.msra.mxu0 0.0
    %203 = vmatprep.subr.mxu0 0.0
    %204 = vmatpush1.msra.mxu0 0.0
    %205 = vmatprep.subr.mxu0 0.0
    %206 = vmatpush1.msra.mxu0 0.0
    %207 = vmatprep.subr.mxu0 0.0
    %208 = vmatpush1.msra.mxu0 0.0
    %209 = vmatprep.subr.mxu0 0.0
    %210 = vmatpush1.msra.mxu0 0.0
    %211 = vmatprep.subr.mxu0 0.0
    %212 = vmatpush1.msra.mxu0 0.0
    %213 = vmatprep.mubr.f32.mxu0 0.0
    %214 = vmatmul.mubr.f32.gmra.mrb[0].mxu0 %v147
    %v215 = vpop.f32.mrb[0].mxu0
    %v216 = vadd.f32 0.0, %v215
    %v217 = vpop.f32.mrb[0].mxu0
    %218 = vdwg.mxu0
    %s219 = scalar_lea.vmem %s2, 8
    %v220 = vld [vmem:[%s219] sm:$0xff]
    %vm221 = vcmask 64512
    %v223 = vsel %vm221, %v216, 0
    %225 = vmatprep.subr.mxu0 0.0
    %226 = vmatpush1.msra.mxu0 %v220
    %227 = vmatprep.subr.mxu0 0.0
    %228 = vmatpush1.msra.mxu0 0.0
    %229 = vmatprep.subr.mxu0 0.0
    %230 = vmatpush1.msra.mxu0 0.0
    %231 = vmatprep.subr.mxu0 0.0
    %232 = vmatpush1.msra.mxu0 0.0
    %233 = vmatprep.subr.mxu0 0.0
    %234 = vmatpush1.msra.mxu0 0.0
    %235 = vmatprep.subr.mxu0 0.0
    %236 = vmatpush1.msra.mxu0 0.0
    %237 = vmatprep.subr.mxu0 0.0
    %238 = vmatpush1.msra.mxu0 0.0
    %239 = vmatprep.subr.mxu0 0.0
    %240 = vmatpush1.msra.mxu0 0.0
    %241 = vmatprep.subr.mxu0 0.0
    %242 = vmatpush1.msra.mxu0 0.0
    %243 = vmatprep.subr.mxu0 0.0
    %244 = vmatpush1.msra.mxu0 0.0
    %245 = vmatprep.subr.mxu0 0.0
    %246 = vmatpush1.msra.mxu0 0.0
    %247 = vmatprep.subr.mxu0 0.0
    %248 = vmatpush1.msra.mxu0 0.0
    %249 = vmatprep.subr.mxu0 0.0
    %250 = vmatpush1.msra.mxu0 0.0
    %251 = vmatprep.subr.mxu0 0.0
    %252 = vmatpush1.msra.mxu0 0.0
    %253 = vmatprep.subr.mxu0 0.0
    %254 = vmatpush1.msra.mxu0 0.0
    %255 = vmatprep.subr.mxu0 0.0
    %256 = vmatpush1.msra.mxu0 0.0
    %257 = vmatprep.subr.mxu0 0.0
    %258 = vmatpush1.msra.mxu0 0.0
    %259 = vmatprep.subr.mxu0 0.0
    %260 = vmatpush1.msra.mxu0 0.0
    %261 = vmatprep.subr.mxu0 0.0
    %262 = vmatpush1.msra.mxu0 0.0
    %263 = vmatprep.subr.mxu0 0.0
    %264 = vmatpush1.msra.mxu0 0.0
    %265 = vmatprep.subr.mxu0 0.0
    %266 = vmatpush1.msra.mxu0 0.0
    %267 = vmatprep.subr.mxu0 0.0
    %268 = vmatpush1.msra.mxu0 0.0
    %269 = vmatprep.subr.mxu0 0.0
    %270 = vmatpush1.msra.mxu0 0.0
    %271 = vmatprep.subr.mxu0 0.0
    %272 = vmatpush1.msra.mxu0 0.0
    %273 = vmatprep.subr.mxu0 0.0
    %274 = vmatpush1.msra.mxu0 0.0
    %275 = vmatprep.subr.mxu0 0.0
    %276 = vmatpush1.msra.mxu0 0.0
    %277 = vmatprep.subr.mxu0 0.0
    %278 = vmatpush1.msra.mxu0 0.0
    %279 = vmatprep.subr.mxu0 0.0
    %280 = vmatpush1.msra.mxu0 0.0
    %281 = vmatprep.subr.mxu0 0.0
    %282 = vmatpush1.msra.mxu0 0.0
    %283 = vmatprep.subr.mxu0 0.0
    %284 = vmatpush1.msra.mxu0 0.0
    %285 = vmatprep.subr.mxu0 0.0
    %286 = vmatpush1.msra.mxu0 0.0
    %287 = vmatprep.subr.mxu0 0.0
    %288 = vmatpush1.msra.mxu0 0.0
    %289 = vmatprep.mubr.f32.mxu0 0.0
    %290 = vmatmul.mubr.f32.gmra.mrb[0].mxu0 %v223
    %v291 = vpop.f32.mrb[0].mxu0
    %v292 = vadd.f32 0.0, %v291
    %v293 = vpop.f32.mrb[0].mxu0
    %294 = vdwg.mxu0
    %v296 = vsel %vm221, %v129, 0
    %298 = vmatprep.subr.mxu0 0.0
    %299 = vmatpush1.msra.mxu0 %v132
    %300 = vmatprep.subr.mxu0 0.0
    %301 = vmatpush1.msra.mxu0 0.0
    %302 = vmatprep.subr.mxu0 0.0
    %303 = vmatpush1.msra.mxu0 0.0
    %304 = vmatprep.subr.mxu0 0.0
    %305 = vmatpush1.msra.mxu0 0.0
    %306 = vmatprep.subr.mxu0 0.0
    %307 = vmatpush1.msra.mxu0 0.0
    %308 = vmatprep.subr.mxu0 0.0
    %309 = vmatpush1.msra.mxu0 0.0
    %310 = vmatprep.subr.mxu0 0.0
    %311 = vmatpush1.msra.mxu0 0.0
    %312 = vmatprep.subr.mxu0 0.0
    %313 = vmatpush1.msra.mxu0 0.0
    %314 = vmatprep.subr.mxu0 0.0
    %315 = vmatpush1.msra.mxu0 0.0
    %316 = vmatprep.subr.mxu0 0.0
    %317 = vmatpush1.msra.mxu0 0.0
    %318 = vmatprep.subr.mxu0 0.0
    %319 = vmatpush1.msra.mxu0 0.0
    %320 = vmatprep.subr.mxu0 0.0
    %321 = vmatpush1.msra.mxu0 0.0
    %322 = vmatprep.subr.mxu0 0.0
    %323 = vmatpush1.msra.mxu0 0.0
    %324 = vmatprep.subr.mxu0 0.0
    %325 = vmatpush1.msra.mxu0 0.0
    %326 = vmatprep.subr.mxu0 0.0
    %327 = vmatpush1.msra.mxu0 0.0
    %328 = vmatprep.subr.mxu0 0.0
    %329 = vmatpush1.msra.mxu0 0.0
    %330 = vmatprep.subr.mxu0 0.0
    %331 = vmatpush1.msra.mxu0 0.0
    %332 = vmatprep.subr.mxu0 0.0
    %333 = vmatpush1.msra.mxu0 0.0
    %334 = vmatprep.subr.mxu0 0.0
    %335 = vmatpush1.msra.mxu0 0.0
    %336 = vmatprep.subr.mxu0 0.0
    %337 = vmatpush1.msra.mxu0 0.0
    %338 = vmatprep.subr.mxu0 0.0
    %339 = vmatpush1.msra.mxu0 0.0
    %340 = vmatprep.subr.mxu0 0.0
    %341 = vmatpush1.msra.mxu0 0.0
    %342 = vmatprep.subr.mxu0 0.0
    %343 = vmatpush1.msra.mxu0 0.0
    %344 = vmatprep.subr.mxu0 0.0
    %345 = vmatpush1.msra.mxu0 0.0
    %346 = vmatprep.subr.mxu0 0.0
    %347 = vmatpush1.msra.mxu0 0.0
    %348 = vmatprep.subr.mxu0 0.0
    %349 = vmatpush1.msra.mxu0 0.0
    %350 = vmatprep.subr.mxu0 0.0
    %351 = vmatpush1.msra.mxu0 0.0
    %352 = vmatprep.subr.mxu0 0.0
    %353 = vmatpush1.msra.mxu0 0.0
    %354 = vmatprep.subr.mxu0 0.0
    %355 = vmatpush1.msra.mxu0 0.0
    %356 = vmatprep.subr.mxu0 0.0
    %357 = vmatpush1.msra.mxu0 0.0
    %358 = vmatprep.subr.mxu0 0.0
    %359 = vmatpush1.msra.mxu0 0.0
    %360 = vmatprep.subr.mxu0 0.0
    %361 = vmatpush1.msra.mxu0 0.0
    %362 = vmatprep.mubr.f32.mxu0 0.0
    %363 = vmatmul.mubr.f32.gmra.mrb[0].mxu0 %v296
    %v364 = vpop.f32.mrb[0].mxu0
    %v365 = vadd.f32 %v292, %v364
    %v366 = vpop.f32.mrb[0].mxu0
    %367 = vdwg.mxu0
    %v368 = vld [vmem:[#allocation2 + $0x2] sm:$0x1]
    %v369 = vld [vmem:[#allocation2 + $0xa] sm:$0x1]
    %v370 = vld [vmem:[#allocation2 + $0x12] sm:$0x1]
    %v371 = vld [vmem:[#allocation2 + $0x1a] sm:$0x1]
    %v376 = vrot.slane %v369, 7
    %v377 = vsel %vm51, %v376, %v368
    %v378 = vrot.slane %v370, 6
    %v379 = vsel %vm54, %v378, %v377
    %v380 = vrot.slane %v371, 5
    %v381 = vsel %vm57, %v380, %v379
    %v382 = vsel %vm59, %v381, 0
    %384 = vmatprep.subr.mxu0 0.0
    %385 = vmatpush1.msra.mxu0 %v34
    %386 = vmatprep.subr.mxu0 0.0
    %387 = vmatpush1.msra.mxu0 %v35
    %388 = vmatprep.subr.mxu0 0.0
    %389 = vmatpush1.msra.mxu0 %v36
    %390 = vmatprep.subr.mxu0 0.0
    %391 = vmatpush1.msra.mxu0 %v37
    %392 = vmatprep.subr.mxu0 0.0
    %393 = vmatpush1.msra.mxu0 %v38
    %394 = vmatprep.subr.mxu0 0.0
    %395 = vmatpush1.msra.mxu0 %v39
    %396 = vmatprep.subr.mxu0 0.0
    %397 = vmatpush1.msra.mxu0 %v40
    %398 = vmatprep.subr.mxu0 0.0
    %399 = vmatpush1.msra.mxu0 %v41
    %400 = vmatprep.subr.mxu0 0.0
    %401 = vmatpush1.msra.mxu0 0.0
    %402 = vmatprep.subr.mxu0 0.0
    %403 = vmatpush1.msra.mxu0 0.0
    %404 = vmatprep.subr.mxu0 0.0
    %405 = vmatpush1.msra.mxu0 0.0
    %406 = vmatprep.subr.mxu0 0.0
    %407 = vmatpush1.msra.mxu0 0.0
    %408 = vmatprep.subr.mxu0 0.0
    %409 = vmatpush1.msra.mxu0 0.0
    %410 = vmatprep.subr.mxu0 0.0
    %411 = vmatpush1.msra.mxu0 0.0
    %412 = vmatprep.subr.mxu0 0.0
    %413 = vmatpush1.msra.mxu0 0.0
    %414 = vmatprep.subr.mxu0 0.0
    %415 = vmatpush1.msra.mxu0 0.0
    %416 = vmatprep.subr.mxu0 0.0
    %417 = vmatpush1.msra.mxu0 0.0
    %418 = vmatprep.subr.mxu0 0.0
    %419 = vmatpush1.msra.mxu0 0.0
    %420 = vmatprep.subr.mxu0 0.0
    %421 = vmatpush1.msra.mxu0 0.0
    %422 = vmatprep.subr.mxu0 0.0
    %423 = vmatpush1.msra.mxu0 0.0
    %424 = vmatprep.subr.mxu0 0.0
    %425 = vmatpush1.msra.mxu0 0.0
    %426 = vmatprep.subr.mxu0 0.0
    %427 = vmatpush1.msra.mxu0 0.0
    %428 = vmatprep.subr.mxu0 0.0
    %429 = vmatpush1.msra.mxu0 0.0
    %430 = vmatprep.subr.mxu0 0.0
    %431 = vmatpush1.msra.mxu0 0.0
    %432 = vmatprep.subr.mxu0 0.0
    %433 = vmatpush1.msra.mxu0 0.0
    %434 = vmatprep.subr.mxu0 0.0
    %435 = vmatpush1.msra.mxu0 0.0
    %436 = vmatprep.subr.mxu0 0.0
    %437 = vmatpush1.msra.mxu0 0.0
    %438 = vmatprep.subr.mxu0 0.0
    %439 = vmatpush1.msra.mxu0 0.0
    %440 = vmatprep.subr.mxu0 0.0
    %441 = vmatpush1.msra.mxu0 0.0
    %442 = vmatprep.subr.mxu0 0.0
    %443 = vmatpush1.msra.mxu0 0.0
    %444 = vmatprep.subr.mxu0 0.0
    %445 = vmatpush1.msra.mxu0 0.0
    %446 = vmatprep.subr.mxu0 0.0
    %447 = vmatpush1.msra.mxu0 0.0
    %448 = vmatprep.mubr.f32.mxu0 0.0
    %449 = vmatmul.mubr.f32.gmra.mrb[0].mxu0 %v382
    %v450 = vpop.f32.mrb[0].mxu0
    %v451 = vadd.f32 0.0, %v450
    %v452 = vpop.f32.mrb[0].mxu0
    %453 = vdwg.mxu0
    %s454 = scalar_lea.vmem %s2, 16
    %v455 = vld [vmem:[%s454] sm:$0xff]
    %v457 = vsel %vm221, %v451, 0
    %459 = vmatprep.subr.mxu0 0.0
    %460 = vmatpush1.msra.mxu0 %v455
    %461 = vmatprep.subr.mxu0 0.0
    %462 = vmatpush1.msra.mxu0 0.0
    %463 = vmatprep.subr.mxu0 0.0
    %464 = vmatpush1.msra.mxu0 0.0
    %465 = vmatprep.subr.mxu0 0.0
    %466 = vmatpush1.msra.mxu0 0.0
    %467 = vmatprep.subr.mxu0 0.0
    %468 = vmatpush1.msra.mxu0 0.0
    %469 = vmatprep.subr.mxu0 0.0
    %470 = vmatpush1.msra.mxu0 0.0
    %471 = vmatprep.subr.mxu0 0.0
    %472 = vmatpush1.msra.mxu0 0.0
    %473 = vmatprep.subr.mxu0 0.0
    %474 = vmatpush1.msra.mxu0 0.0
    %475 = vmatprep.subr.mxu0 0.0
    %476 = vmatpush1.msra.mxu0 0.0
    %477 = vmatprep.subr.mxu0 0.0
    %478 = vmatpush1.msra.mxu0 0.0
    %479 = vmatprep.subr.mxu0 0.0
    %480 = vmatpush1.msra.mxu0 0.0
    %481 = vmatprep.subr.mxu0 0.0
    %482 = vmatpush1.msra.mxu0 0.0
    %483 = vmatprep.subr.mxu0 0.0
    %484 = vmatpush1.msra.mxu0 0.0
    %485 = vmatprep.subr.mxu0 0.0
    %486 = vmatpush1.msra.mxu0 0.0
    %487 = vmatprep.subr.mxu0 0.0
    %488 = vmatpush1.msra.mxu0 0.0
    %489 = vmatprep.subr.mxu0 0.0
    %490 = vmatpush1.msra.mxu0 0.0
    %491 = vmatprep.subr.mxu0 0.0
    %492 = vmatpush1.msra.mxu0 0.0
    %493 = vmatprep.subr.mxu0 0.0
    %494 = vmatpush1.msra.mxu0 0.0
    %495 = vmatprep.subr.mxu0 0.0
    %496 = vmatpush1.msra.mxu0 0.0
    %497 = vmatprep.subr.mxu0 0.0
    %498 = vmatpush1.msra.mxu0 0.0
    %499 = vmatprep.subr.mxu0 0.0
    %500 = vmatpush1.msra.mxu0 0.0
    %501 = vmatprep.subr.mxu0 0.0
    %502 = vmatpush1.msra.mxu0 0.0
    %503 = vmatprep.subr.mxu0 0.0
    %504 = vmatpush1.msra.mxu0 0.0
    %505 = vmatprep.subr.mxu0 0.0
    %506 = vmatpush1.msra.mxu0 0.0
    %507 = vmatprep.subr.mxu0 0.0
    %508 = vmatpush1.msra.mxu0 0.0
    %509 = vmatprep.subr.mxu0 0.0
    %510 = vmatpush1.msra.mxu0 0.0
    %511 = vmatprep.subr.mxu0 0.0
    %512 = vmatpush1.msra.mxu0 0.0
    %513 = vmatprep.subr.mxu0 0.0
    %514 = vmatpush1.msra.mxu0 0.0
    %515 = vmatprep.subr.mxu0 0.0
    %516 = vmatpush1.msra.mxu0 0.0
    %517 = vmatprep.subr.mxu0 0.0
    %518 = vmatpush1.msra.mxu0 0.0
    %519 = vmatprep.subr.mxu0 0.0
    %520 = vmatpush1.msra.mxu0 0.0
    %521 = vmatprep.subr.mxu0 0.0
    %522 = vmatpush1.msra.mxu0 0.0
    %523 = vmatprep.mubr.f32.mxu0 0.0
    %524 = vmatmul.mubr.f32.gmra.mrb[0].mxu0 %v457
    %v525 = vpop.f32.mrb[0].mxu0
    %v526 = vadd.f32 0.0, %v525
    %v527 = vpop.f32.mrb[0].mxu0
    %528 = vdwg.mxu0
    %v529 = vadd.f32 %v365, %v526
    %v530 = vld [vmem:[#allocation2 + $0x3] sm:$0x1]
    %v531 = vld [vmem:[#allocation2 + $0xb] sm:$0x1]
    %v532 = vld [vmem:[#allocation2 + $0x13] sm:$0x1]
    %v533 = vld [vmem:[#allocation2 + $0x1b] sm:$0x1]
    %v538 = vrot.slane %v531, 7
    %v539 = vsel %vm51, %v538, %v530
    %v540 = vrot.slane %v532, 6
    %v541 = vsel %vm54, %v540, %v539
    %v542 = vrot.slane %v533, 5
    %v543 = vsel %vm57, %v542, %v541
    %v544 = vsel %vm59, %v543, 0
    %546 = vmatprep.subr.mxu0 0.0
    %547 = vmatpush1.msra.mxu0 %v34
    %548 = vmatprep.subr.mxu0 0.0
    %549 = vmatpush1.msra.mxu0 %v35
    %550 = vmatprep.subr.mxu0 0.0
    %551 = vmatpush1.msra.mxu0 %v36
    %552 = vmatprep.subr.mxu0 0.0
    %553 = vmatpush1.msra.mxu0 %v37
    %554 = vmatprep.subr.mxu0 0.0
    %555 = vmatpush1.msra.mxu0 %v38
    %556 = vmatprep.subr.mxu0 0.0
    %557 = vmatpush1.msra.mxu0 %v39
    %558 = vmatprep.subr.mxu0 0.0
    %559 = vmatpush1.msra.mxu0 %v40
    %560 = vmatprep.subr.mxu0 0.0
    %561 = vmatpush1.msra.mxu0 %v41
    %562 = vmatprep.subr.mxu0 0.0
    %563 = vmatpush1.msra.mxu0 0.0
    %564 = vmatprep.subr.mxu0 0.0
    %565 = vmatpush1.msra.mxu0 0.0
    %566 = vmatprep.subr.mxu0 0.0
    %567 = vmatpush1.msra.mxu0 0.0
    %568 = vmatprep.subr.mxu0 0.0
    %569 = vmatpush1.msra.mxu0 0.0
    %570 = vmatprep.subr.mxu0 0.0
    %571 = vmatpush1.msra.mxu0 0.0
    %572 = vmatprep.subr.mxu0 0.0
    %573 = vmatpush1.msra.mxu0 0.0
    %574 = vmatprep.subr.mxu0 0.0
    %575 = vmatpush1.msra.mxu0 0.0
    %576 = vmatprep.subr.mxu0 0.0
    %577 = vmatpush1.msra.mxu0 0.0
    %578 = vmatprep.subr.mxu0 0.0
    %579 = vmatpush1.msra.mxu0 0.0
    %580 = vmatprep.subr.mxu0 0.0
    %581 = vmatpush1.msra.mxu0 0.0
    %582 = vmatprep.subr.mxu0 0.0
    %583 = vmatpush1.msra.mxu0 0.0
    %584 = vmatprep.subr.mxu0 0.0
    %585 = vmatpush1.msra.mxu0 0.0
    %586 = vmatprep.subr.mxu0 0.0
    %587 = vmatpush1.msra.mxu0 0.0
    %588 = vmatprep.subr.mxu0 0.0
    %589 = vmatpush1.msra.mxu0 0.0
    %590 = vmatprep.subr.mxu0 0.0
    %591 = vmatpush1.msra.mxu0 0.0
    %592 = vmatprep.subr.mxu0 0.0
    %593 = vmatpush1.msra.mxu0 0.0
    %594 = vmatprep.subr.mxu0 0.0
    %595 = vmatpush1.msra.mxu0 0.0
    %596 = vmatprep.subr.mxu0 0.0
    %597 = vmatpush1.msra.mxu0 0.0
    %598 = vmatprep.subr.mxu0 0.0
    %599 = vmatpush1.msra.mxu0 0.0
    %600 = vmatprep.subr.mxu0 0.0
    %601 = vmatpush1.msra.mxu0 0.0
    %602 = vmatprep.subr.mxu0 0.0
    %603 = vmatpush1.msra.mxu0 0.0
    %604 = vmatprep.subr.mxu0 0.0
    %605 = vmatpush1.msra.mxu0 0.0
    %606 = vmatprep.subr.mxu0 0.0
    %607 = vmatpush1.msra.mxu0 0.0
    %608 = vmatprep.subr.mxu0 0.0
    %609 = vmatpush1.msra.mxu0 0.0
    %610 = vmatprep.mubr.f32.mxu0 0.0
    %611 = vmatmul.mubr.f32.gmra.mrb[0].mxu0 %v544
    %v612 = vpop.f32.mrb[0].mxu0
    %v613 = vadd.f32 0.0, %v612
    %v614 = vpop.f32.mrb[0].mxu0
    %615 = vdwg.mxu0
    %s616 = scalar_lea.vmem %s2, 24
    %v617 = vld [vmem:[%s616] sm:$0xff]
    %v619 = vsel %vm221, %v613, 0
    %621 = vmatprep.subr.mxu0 0.0
    %622 = vmatpush1.msra.mxu0 %v617
    %623 = vmatprep.subr.mxu0 0.0
    %624 = vmatpush1.msra.mxu0 0.0
    %625 = vmatprep.subr.mxu0 0.0
    %626 = vmatpush1.msra.mxu0 0.0
    %627 = vmatprep.subr.mxu0 0.0
    %628 = vmatpush1.msra.mxu0 0.0
    %629 = vmatprep.subr.mxu0 0.0
    %630 = vmatpush1.msra.mxu0 0.0
    %631 = vmatprep.subr.mxu0 0.0
    %632 = vmatpush1.msra.mxu0 0.0
    %633 = vmatprep.subr.mxu0 0.0
    %634 = vmatpush1.msra.mxu0 0.0
    %635 = vmatprep.subr.mxu0 0.0
    %636 = vmatpush1.msra.mxu0 0.0
    %637 = vmatprep.subr.mxu0 0.0
    %638 = vmatpush1.msra.mxu0 0.0
    %639 = vmatprep.subr.mxu0 0.0
    %640 = vmatpush1.msra.mxu0 0.0
    %641 = vmatprep.subr.mxu0 0.0
    %642 = vmatpush1.msra.mxu0 0.0
    %643 = vmatprep.subr.mxu0 0.0
    %644 = vmatpush1.msra.mxu0 0.0
    %645 = vmatprep.subr.mxu0 0.0
    %646 = vmatpush1.msra.mxu0 0.0
    %647 = vmatprep.subr.mxu0 0.0
    %648 = vmatpush1.msra.mxu0 0.0
    %649 = vmatprep.subr.mxu0 0.0
    %650 = vmatpush1.msra.mxu0 0.0
    %651 = vmatprep.subr.mxu0 0.0
    %652 = vmatpush1.msra.mxu0 0.0
    %653 = vmatprep.subr.mxu0 0.0
    %654 = vmatpush1.msra.mxu0 0.0
    %655 = vmatprep.subr.mxu0 0.0
    %656 = vmatpush1.msra.mxu0 0.0
    %657 = vmatprep.subr.mxu0 0.0
    %658 = vmatpush1.msra.mxu0 0.0
    %659 = vmatprep.subr.mxu0 0.0
    %660 = vmatpush1.msra.mxu0 0.0
    %661 = vmatprep.subr.mxu0 0.0
    %662 = vmatpush1.msra.mxu0 0.0
    %663 = vmatprep.subr.mxu0 0.0
    %664 = vmatpush1.msra.mxu0 0.0
    %665 = vmatprep.subr.mxu0 0.0
    %666 = vmatpush1.msra.mxu0 0.0
    %667 = vmatprep.subr.mxu0 0.0
    %668 = vmatpush1.msra.mxu0 0.0
    %669 = vmatprep.subr.mxu0 0.0
    %670 = vmatpush1.msra.mxu0 0.0
    %671 = vmatprep.subr.mxu0 0.0
    %672 = vmatpush1.msra.mxu0 0.0
    %673 = vmatprep.subr.mxu0 0.0
    %674 = vmatpush1.msra.mxu0 0.0
    %675 = vmatprep.subr.mxu0 0.0
    %676 = vmatpush1.msra.mxu0 0.0
    %677 = vmatprep.subr.mxu0 0.0
    %678 = vmatpush1.msra.mxu0 0.0
    %679 = vmatprep.subr.mxu0 0.0
    %680 = vmatpush1.msra.mxu0 0.0
    %681 = vmatprep.subr.mxu0 0.0
    %682 = vmatpush1.msra.mxu0 0.0
    %683 = vmatprep.subr.mxu0 0.0
    %684 = vmatpush1.msra.mxu0 0.0
    %685 = vmatprep.mubr.f32.mxu0 0.0
    %686 = vmatmul.mubr.f32.gmra.mrb[0].mxu0 %v619
    %v687 = vpop.f32.mrb[0].mxu0
    %v688 = vadd.f32 0.0, %v687
    %v689 = vpop.f32.mrb[0].mxu0
    %690 = vdwg.mxu0
    %v691 = vadd.f32 %v529, %v688
    %v692 = vld [vmem:[#allocation2 + $0x4] sm:$0x1]
    %v693 = vld [vmem:[#allocation2 + $0xc] sm:$0x1]
    %v694 = vld [vmem:[#allocation2 + $0x14] sm:$0x1]
    %v695 = vld [vmem:[#allocation2 + $0x1c] sm:$0x1]
    %v700 = vrot.slane %v693, 7
    %v701 = vsel %vm51, %v700, %v692
    %v702 = vrot.slane %v694, 6
    %v703 = vsel %vm54, %v702, %v701
    %v704 = vrot.slane %v695, 5
    %v705 = vsel %vm57, %v704, %v703
    %v706 = vsel %vm59, %v705, 0
    %708 = vmatprep.subr.mxu0 0.0
    %709 = vmatpush1.msra.mxu0 %v34
    %710 = vmatprep.subr.mxu0 0.0
    %711 = vmatpush1.msra.mxu0 %v35
    %712 = vmatprep.subr.mxu0 0.0
    %713 = vmatpush1.msra.mxu0 %v36
    %714 = vmatprep.subr.mxu0 0.0
    %715 = vmatpush1.msra.mxu0 %v37
    %716 = vmatprep.subr.mxu0 0.0
    %717 = vmatpush1.msra.mxu0 %v38
    %718 = vmatprep.subr.mxu0 0.0
    %719 = vmatpush1.msra.mxu0 %v39
    %720 = vmatprep.subr.mxu0 0.0
    %721 = vmatpush1.msra.mxu0 %v40
    %722 = vmatprep.subr.mxu0 0.0
    %723 = vmatpush1.msra.mxu0 %v41
    %724 = vmatprep.subr.mxu0 0.0
    %725 = vmatpush1.msra.mxu0 0.0
    %726 = vmatprep.subr.mxu0 0.0
    %727 = vmatpush1.msra.mxu0 0.0
    %728 = vmatprep.subr.mxu0 0.0
    %729 = vmatpush1.msra.mxu0 0.0
    %730 = vmatprep.subr.mxu0 0.0
    %731 = vmatpush1.msra.mxu0 0.0
    %732 = vmatprep.subr.mxu0 0.0
    %733 = vmatpush1.msra.mxu0 0.0
    %734 = vmatprep.subr.mxu0 0.0
    %735 = vmatpush1.msra.mxu0 0.0
    %736 = vmatprep.subr.mxu0 0.0
    %737 = vmatpush1.msra.mxu0 0.0
    %738 = vmatprep.subr.mxu0 0.0
    %739 = vmatpush1.msra.mxu0 0.0
    %740 = vmatprep.subr.mxu0 0.0
    %741 = vmatpush1.msra.mxu0 0.0
    %742 = vmatprep.subr.mxu0 0.0
    %743 = vmatpush1.msra.mxu0 0.0
    %744 = vmatprep.subr.mxu0 0.0
    %745 = vmatpush1.msra.mxu0 0.0
    %746 = vmatprep.subr.mxu0 0.0
    %747 = vmatpush1.msra.mxu0 0.0
    %748 = vmatprep.subr.mxu0 0.0
    %749 = vmatpush1.msra.mxu0 0.0
    %750 = vmatprep.subr.mxu0 0.0
    %751 = vmatpush1.msra.mxu0 0.0
    %752 = vmatprep.subr.mxu0 0.0
    %753 = vmatpush1.msra.mxu0 0.0
    %754 = vmatprep.subr.mxu0 0.0
    %755 = vmatpush1.msra.mxu0 0.0
    %756 = vmatprep.subr.mxu0 0.0
    %757 = vmatpush1.msra.mxu0 0.0
    %758 = vmatprep.subr.mxu0 0.0
    %759 = vmatpush1.msra.mxu0 0.0
    %760 = vmatprep.subr.mxu0 0.0
    %761 = vmatpush1.msra.mxu0 0.0
    %762 = vmatprep.subr.mxu0 0.0
    %763 = vmatpush1.msra.mxu0 0.0
    %764 = vmatprep.subr.mxu0 0.0
    %765 = vmatpush1.msra.mxu0 0.0
    %766 = vmatprep.subr.mxu0 0.0
    %767 = vmatpush1.msra.mxu0 0.0
    %768 = vmatprep.subr.mxu0 0.0
    %769 = vmatpush1.msra.mxu0 0.0
    %770 = vmatprep.subr.mxu0 0.0
    %771 = vmatpush1.msra.mxu0 0.0
    %772 = vmatprep.mubr.f32.mxu0 0.0
    %773 = vmatmul.mubr.f32.gmra.mrb[0].mxu0 %v706
    %v774 = vpop.f32.mrb[0].mxu0
    %v775 = vadd.f32 0.0, %v774
    %v776 = vpop.f32.mrb[0].mxu0
    %777 = vdwg.mxu0
    %s778 = scalar_lea.vmem %s2, 32
    %v779 = vld [vmem:[%s778] sm:$0xff]
    %v781 = vsel %vm221, %v775, 0
    %783 = vmatprep.subr.mxu0 0.0
    %784 = vmatpush1.msra.mxu0 %v779
    %785 = vmatprep.subr.mxu0 0.0
    %786 = vmatpush1.msra.mxu0 0.0
    %787 = vmatprep.subr.mxu0 0.0
    %788 = vmatpush1.msra.mxu0 0.0
    %789 = vmatprep.subr.mxu0 0.0
    %790 = vmatpush1.msra.mxu0 0.0
    %791 = vmatprep.subr.mxu0 0.0
    %792 = vmatpush1.msra.mxu0 0.0
    %793 = vmatprep.subr.mxu0 0.0
    %794 = vmatpush1.msra.mxu0 0.0
    %795 = vmatprep.subr.mxu0 0.0
    %796 = vmatpush1.msra.mxu0 0.0
    %797 = vmatprep.subr.mxu0 0.0
    %798 = vmatpush1.msra.mxu0 0.0
    %799 = vmatprep.subr.mxu0 0.0
    %800 = vmatpush1.msra.mxu0 0.0
    %801 = vmatprep.subr.mxu0 0.0
    %802 = vmatpush1.msra.mxu0 0.0
    %803 = vmatprep.subr.mxu0 0.0
    %804 = vmatpush1.msra.mxu0 0.0
    %805 = vmatprep.subr.mxu0 0.0
    %806 = vmatpush1.msra.mxu0 0.0
    %807 = vmatprep.subr.mxu0 0.0
    %808 = vmatpush1.msra.mxu0 0.0
    %809 = vmatprep.subr.mxu0 0.0
    %810 = vmatpush1.msra.mxu0 0.0
    %811 = vmatprep.subr.mxu0 0.0
    %812 = vmatpush1.msra.mxu0 0.0
    %813 = vmatprep.subr.mxu0 0.0
    %814 = vmatpush1.msra.mxu0 0.0
    %815 = vmatprep.subr.mxu0 0.0
    %816 = vmatpush1.msra.mxu0 0.0
    %817 = vmatprep.subr.mxu0 0.0
    %818 = vmatpush1.msra.mxu0 0.0
    %819 = vmatprep.subr.mxu0 0.0
    %820 = vmatpush1.msra.mxu0 0.0
    %821 = vmatprep.subr.mxu0 0.0
    %822 = vmatpush1.msra.mxu0 0.0
    %823 = vmatprep.subr.mxu0 0.0
    %824 = vmatpush1.msra.mxu0 0.0
    %825 = vmatprep.subr.mxu0 0.0
    %826 = vmatpush1.msra.mxu0 0.0
    %827 = vmatprep.subr.mxu0 0.0
    %828 = vmatpush1.msra.mxu0 0.0
    %829 = vmatprep.subr.mxu0 0.0
    %830 = vmatpush1.msra.mxu0 0.0
    %831 = vmatprep.subr.mxu0 0.0
    %832 = vmatpush1.msra.mxu0 0.0
    %833 = vmatprep.subr.mxu0 0.0
    %834 = vmatpush1.msra.mxu0 0.0
    %835 = vmatprep.subr.mxu0 0.0
    %836 = vmatpush1.msra.mxu0 0.0
    %837 = vmatprep.subr.mxu0 0.0
    %838 = vmatpush1.msra.mxu0 0.0
    %839 = vmatprep.subr.mxu0 0.0
    %840 = vmatpush1.msra.mxu0 0.0
    %841 = vmatprep.subr.mxu0 0.0
    %842 = vmatpush1.msra.mxu0 0.0
    %843 = vmatprep.subr.mxu0 0.0
    %844 = vmatpush1.msra.mxu0 0.0
    %845 = vmatprep.subr.mxu0 0.0
    %846 = vmatpush1.msra.mxu0 0.0
    %847 = vmatprep.mubr.f32.mxu0 0.0
    %848 = vmatmul.mubr.f32.gmra.mrb[0].mxu0 %v781
    %v849 = vpop.f32.mrb[0].mxu0
    %v850 = vadd.f32 0.0, %v849
    %v851 = vpop.f32.mrb[0].mxu0
    %852 = vdwg.mxu0
    %v853 = vadd.f32 %v691, %v850
    %v854 = vld [vmem:[#allocation2 + $0x5] sm:$0x1]
    %v855 = vld [vmem:[#allocation2 + $0xd] sm:$0x1]
    %v856 = vld [vmem:[#allocation2 + $0x15] sm:$0x1]
    %v857 = vld [vmem:[#allocation2 + $0x1d] sm:$0x1]
    %v862 = vrot.slane %v855, 7
    %v863 = vsel %vm51, %v862, %v854
    %v864 = vrot.slane %v856, 6
    %v865 = vsel %vm54, %v864, %v863
    %v866 = vrot.slane %v857, 5
    %v867 = vsel %vm57, %v866, %v865
    %v868 = vsel %vm59, %v867, 0
    %870 = vmatprep.subr.mxu0 0.0
    %871 = vmatpush1.msra.mxu0 %v34
    %872 = vmatprep.subr.mxu0 0.0
    %873 = vmatpush1.msra.mxu0 %v35
    %874 = vmatprep.subr.mxu0 0.0
    %875 = vmatpush1.msra.mxu0 %v36
    %876 = vmatprep.subr.mxu0 0.0
    %877 = vmatpush1.msra.mxu0 %v37
    %878 = vmatprep.subr.mxu0 0.0
    %879 = vmatpush1.msra.mxu0 %v38
    %880 = vmatprep.subr.mxu0 0.0
    %881 = vmatpush1.msra.mxu0 %v39
    %882 = vmatprep.subr.mxu0 0.0
    %883 = vmatpush1.msra.mxu0 %v40
    %884 = vmatprep.subr.mxu0 0.0
    %885 = vmatpush1.msra.mxu0 %v41
    %886 = vmatprep.subr.mxu0 0.0
    %887 = vmatpush1.msra.mxu0 0.0
    %888 = vmatprep.subr.mxu0 0.0
    %889 = vmatpush1.msra.mxu0 0.0
    %890 = vmatprep.subr.mxu0 0.0
    %891 = vmatpush1.msra.mxu0 0.0
    %892 = vmatprep.subr.mxu0 0.0
    %893 = vmatpush1.msra.mxu0 0.0
    %894 = vmatprep.subr.mxu0 0.0
    %895 = vmatpush1.msra.mxu0 0.0
    %896 = vmatprep.subr.mxu0 0.0
    %897 = vmatpush1.msra.mxu0 0.0
    %898 = vmatprep.subr.mxu0 0.0
    %899 = vmatpush1.msra.mxu0 0.0
    %900 = vmatprep.subr.mxu0 0.0
    %901 = vmatpush1.msra.mxu0 0.0
    %902 = vmatprep.subr.mxu0 0.0
    %903 = vmatpush1.msra.mxu0 0.0
    %904 = vmatprep.subr.mxu0 0.0
    %905 = vmatpush1.msra.mxu0 0.0
    %906 = vmatprep.subr.mxu0 0.0
    %907 = vmatpush1.msra.mxu0 0.0
    %908 = vmatprep.subr.mxu0 0.0
    %909 = vmatpush1.msra.mxu0 0.0
    %910 = vmatprep.subr.mxu0 0.0
    %911 = vmatpush1.msra.mxu0 0.0
    %912 = vmatprep.subr.mxu0 0.0
    %913 = vmatpush1.msra.mxu0 0.0
    %914 = vmatprep.subr.mxu0 0.0
    %915 = vmatpush1.msra.mxu0 0.0
    %916 = vmatprep.subr.mxu0 0.0
    %917 = vmatpush1.msra.mxu0 0.0
    %918 = vmatprep.subr.mxu0 0.0
    %919 = vmatpush1.msra.mxu0 0.0
    %920 = vmatprep.subr.mxu0 0.0
    %921 = vmatpush1.msra.mxu0 0.0
    %922 = vmatprep.subr.mxu0 0.0
    %923 = vmatpush1.msra.mxu0 0.0
    %924 = vmatprep.subr.mxu0 0.0
    %925 = vmatpush1.msra.mxu0 0.0
    %926 = vmatprep.subr.mxu0 0.0
    %927 = vmatpush1.msra.mxu0 0.0
    %928 = vmatprep.subr.mxu0 0.0
    %929 = vmatpush1.msra.mxu0 0.0
    %930 = vmatprep.subr.mxu0 0.0
    %931 = vmatpush1.msra.mxu0 0.0
    %932 = vmatprep.subr.mxu0 0.0
    %933 = vmatpush1.msra.mxu0 0.0
    %934 = vmatprep.mubr.f32.mxu0 0.0
    %935 = vmatmul.mubr.f32.gmra.mrb[0].mxu0 %v868
    %v936 = vpop.f32.mrb[0].mxu0
    %v937 = vadd.f32 0.0, %v936
    %v938 = vpop.f32.mrb[0].mxu0
    %939 = vdwg.mxu0
    %s940 = scalar_lea.vmem %s2, 40
    %v941 = vld [vmem:[%s940] sm:$0xff]
    %v943 = vsel %vm221, %v937, 0
    %945 = vmatprep.subr.mxu0 0.0
    %946 = vmatpush1.msra.mxu0 %v941
    %947 = vmatprep.subr.mxu0 0.0
    %948 = vmatpush1.msra.mxu0 0.0
    %949 = vmatprep.subr.mxu0 0.0
    %950 = vmatpush1.msra.mxu0 0.0
    %951 = vmatprep.subr.mxu0 0.0
    %952 = vmatpush1.msra.mxu0 0.0
    %953 = vmatprep.subr.mxu0 0.0
    %954 = vmatpush1.msra.mxu0 0.0
    %955 = vmatprep.subr.mxu0 0.0
    %956 = vmatpush1.msra.mxu0 0.0
    %957 = vmatprep.subr.mxu0 0.0
    %958 = vmatpush1.msra.mxu0 0.0
    %959 = vmatprep.subr.mxu0 0.0
    %960 = vmatpush1.msra.mxu0 0.0
    %961 = vmatprep.subr.mxu0 0.0
    %962 = vmatpush1.msra.mxu0 0.0
    %963 = vmatprep.subr.mxu0 0.0
    %964 = vmatpush1.msra.mxu0 0.0
    %965 = vmatprep.subr.mxu0 0.0
    %966 = vmatpush1.msra.mxu0 0.0
    %967 = vmatprep.subr.mxu0 0.0
    %968 = vmatpush1.msra.mxu0 0.0
    %969 = vmatprep.subr.mxu0 0.0
    %970 = vmatpush1.msra.mxu0 0.0
    %971 = vmatprep.subr.mxu0 0.0
    %972 = vmatpush1.msra.mxu0 0.0
    %973 = vmatprep.subr.mxu0 0.0
    %974 = vmatpush1.msra.mxu0 0.0
    %975 = vmatprep.subr.mxu0 0.0
    %976 = vmatpush1.msra.mxu0 0.0
    %977 = vmatprep.subr.mxu0 0.0
    %978 = vmatpush1.msra.mxu0 0.0
    %979 = vmatprep.subr.mxu0 0.0
    %980 = vmatpush1.msra.mxu0 0.0
    %981 = vmatprep.subr.mxu0 0.0
    %982 = vmatpush1.msra.mxu0 0.0
    %983 = vmatprep.subr.mxu0 0.0
    %984 = vmatpush1.msra.mxu0 0.0
    %985 = vmatprep.subr.mxu0 0.0
    %986 = vmatpush1.msra.mxu0 0.0
    %987 = vmatprep.subr.mxu0 0.0
    %988 = vmatpush1.msra.mxu0 0.0
    %989 = vmatprep.subr.mxu0 0.0
    %990 = vmatpush1.msra.mxu0 0.0
    %991 = vmatprep.subr.mxu0 0.0
    %992 = vmatpush1.msra.mxu0 0.0
    %993 = vmatprep.subr.mxu0 0.0
    %994 = vmatpush1.msra.mxu0 0.0
    %995 = vmatprep.subr.mxu0 0.0
    %996 = vmatpush1.msra.mxu0 0.0
    %997 = vmatprep.subr.mxu0 0.0
    %998 = vmatpush1.msra.mxu0 0.0
    %999 = vmatprep.subr.mxu0 0.0
    %1000 = vmatpush1.msra.mxu0 0.0
    %1001 = vmatprep.subr.mxu0 0.0
    %1002 = vmatpush1.msra.mxu0 0.0
    %1003 = vmatprep.subr.mxu0 0.0
    %1004 = vmatpush1.msra.mxu0 0.0
    %1005 = vmatprep.subr.mxu0 0.0
    %1006 = vmatpush1.msra.mxu0 0.0
    %1007 = vmatprep.subr.mxu0 0.0
    %1008 = vmatpush1.msra.mxu0 0.0
    %1009 = vmatprep.mubr.f32.mxu0 0.0
    %1010 = vmatmul.mubr.f32.gmra.mrb[0].mxu0 %v943
    %v1011 = vpop.f32.mrb[0].mxu0
    %v1012 = vadd.f32 0.0, %v1011
    %v1013 = vpop.f32.mrb[0].mxu0
    %1014 = vdwg.mxu0
    %v1015 = vadd.f32 %v853, %v1012
    %v1016 = vld [vmem:[#allocation2 + $0x6] sm:$0x1]
    %v1017 = vld [vmem:[#allocation2 + $0xe] sm:$0x1]
    %v1018 = vld [vmem:[#allocation2 + $0x16] sm:$0x1]
    %v1019 = vld [vmem:[#allocation2 + $0x1e] sm:$0x1]
    %v1024 = vrot.slane %v1017, 7
    %v1025 = vsel %vm51, %v1024, %v1016
    %v1026 = vrot.slane %v1018, 6
    %v1027 = vsel %vm54, %v1026, %v1025
    %v1028 = vrot.slane %v1019, 5
    %v1029 = vsel %vm57, %v1028, %v1027
    %v1030 = vsel %vm59, %v1029, 0
    %1032 = vmatprep.subr.mxu0 0.0
    %1033 = vmatpush1.msra.mxu0 %v34
    %1034 = vmatprep.subr.mxu0 0.0
    %1035 = vmatpush1.msra.mxu0 %v35
    %1036 = vmatprep.subr.mxu0 0.0
    %1037 = vmatpush1.msra.mxu0 %v36
    %1038 = vmatprep.subr.mxu0 0.0
    %1039 = vmatpush1.msra.mxu0 %v37
    %1040 = vmatprep.subr.mxu0 0.0
    %1041 = vmatpush1.msra.mxu0 %v38
    %1042 = vmatprep.subr.mxu0 0.0
    %1043 = vmatpush1.msra.mxu0 %v39
    %1044 = vmatprep.subr.mxu0 0.0
    %1045 = vmatpush1.msra.mxu0 %v40
    %1046 = vmatprep.subr.mxu0 0.0
    %1047 = vmatpush1.msra.mxu0 %v41
    %1048 = vmatprep.subr.mxu0 0.0
    %1049 = vmatpush1.msra.mxu0 0.0
    %1050 = vmatprep.subr.mxu0 0.0
    %1051 = vmatpush1.msra.mxu0 0.0
    %1052 = vmatprep.subr.mxu0 0.0
    %1053 = vmatpush1.msra.mxu0 0.0
    %1054 = vmatprep.subr.mxu0 0.0
    %1055 = vmatpush1.msra.mxu0 0.0
    %1056 = vmatprep.subr.mxu0 0.0
    %1057 = vmatpush1.msra.mxu0 0.0
    %1058 = vmatprep.subr.mxu0 0.0
    %1059 = vmatpush1.msra.mxu0 0.0
    %1060 = vmatprep.subr.mxu0 0.0
    %1061 = vmatpush1.msra.mxu0 0.0
    %1062 = vmatprep.subr.mxu0 0.0
    %1063 = vmatpush1.msra.mxu0 0.0
    %1064 = vmatprep.subr.mxu0 0.0
    %1065 = vmatpush1.msra.mxu0 0.0
    %1066 = vmatprep.subr.mxu0 0.0
    %1067 = vmatpush1.msra.mxu0 0.0
    %1068 = vmatprep.subr.mxu0 0.0
    %1069 = vmatpush1.msra.mxu0 0.0
    %1070 = vmatprep.subr.mxu0 0.0
    %1071 = vmatpush1.msra.mxu0 0.0
    %1072 = vmatprep.subr.mxu0 0.0
    %1073 = vmatpush1.msra.mxu0 0.0
    %1074 = vmatprep.subr.mxu0 0.0
    %1075 = vmatpush1.msra.mxu0 0.0
    %1076 = vmatprep.subr.mxu0 0.0
    %1077 = vmatpush1.msra.mxu0 0.0
    %1078 = vmatprep.subr.mxu0 0.0
    %1079 = vmatpush1.msra.mxu0 0.0
    %1080 = vmatprep.subr.mxu0 0.0
    %1081 = vmatpush1.msra.mxu0 0.0
    %1082 = vmatprep.subr.mxu0 0.0
    %1083 = vmatpush1.msra.mxu0 0.0
    %1084 = vmatprep.subr.mxu0 0.0
    %1085 = vmatpush1.msra.mxu0 0.0
    %1086 = vmatprep.subr.mxu0 0.0
    %1087 = vmatpush1.msra.mxu0 0.0
    %1088 = vmatprep.subr.mxu0 0.0
    %1089 = vmatpush1.msra.mxu0 0.0
    %1090 = vmatprep.subr.mxu0 0.0
    %1091 = vmatpush1.msra.mxu0 0.0
    %1092 = vmatprep.subr.mxu0 0.0
    %1093 = vmatpush1.msra.mxu0 0.0
    %1094 = vmatprep.subr.mxu0 0.0
    %1095 = vmatpush1.msra.mxu0 0.0
    %1096 = vmatprep.mubr.f32.mxu0 0.0
    %1097 = vmatmul.mubr.f32.gmra.mrb[0].mxu0 %v1030
    %v1098 = vpop.f32.mrb[0].mxu0
    %v1099 = vadd.f32 0.0, %v1098
    %v1100 = vpop.f32.mrb[0].mxu0
    %1101 = vdwg.mxu0
    %s1102 = scalar_lea.vmem %s2, 48
    %v1103 = vld [vmem:[%s1102] sm:$0xff]
    %v1105 = vsel %vm221, %v1099, 0
    %1107 = vmatprep.subr.mxu0 0.0
    %1108 = vmatpush1.msra.mxu0 %v1103
    %1109 = vmatprep.subr.mxu0 0.0
    %1110 = vmatpush1.msra.mxu0 0.0
    %1111 = vmatprep.subr.mxu0 0.0
    %1112 = vmatpush1.msra.mxu0 0.0
    %1113 = vmatprep.subr.mxu0 0.0
    %1114 = vmatpush1.msra.mxu0 0.0
    %1115 = vmatprep.subr.mxu0 0.0
    %1116 = vmatpush1.msra.mxu0 0.0
    %1117 = vmatprep.subr.mxu0 0.0
    %1118 = vmatpush1.msra.mxu0 0.0
    %1119 = vmatprep.subr.mxu0 0.0
    %1120 = vmatpush1.msra.mxu0 0.0
    %1121 = vmatprep.subr.mxu0 0.0
    %1122 = vmatpush1.msra.mxu0 0.0
    %1123 = vmatprep.subr.mxu0 0.0
    %1124 = vmatpush1.msra.mxu0 0.0
    %1125 = vmatprep.subr.mxu0 0.0
    %1126 = vmatpush1.msra.mxu0 0.0
    %1127 = vmatprep.subr.mxu0 0.0
    %1128 = vmatpush1.msra.mxu0 0.0
    %1129 = vmatprep.subr.mxu0 0.0
    %1130 = vmatpush1.msra.mxu0 0.0
    %1131 = vmatprep.subr.mxu0 0.0
    %1132 = vmatpush1.msra.mxu0 0.0
    %1133 = vmatprep.subr.mxu0 0.0
    %1134 = vmatpush1.msra.mxu0 0.0
    %1135 = vmatprep.subr.mxu0 0.0
    %1136 = vmatpush1.msra.mxu0 0.0
    %1137 = vmatprep.subr.mxu0 0.0
    %1138 = vmatpush1.msra.mxu0 0.0
    %1139 = vmatprep.subr.mxu0 0.0
    %1140 = vmatpush1.msra.mxu0 0.0
    %1141 = vmatprep.subr.mxu0 0.0
    %1142 = vmatpush1.msra.mxu0 0.0
    %1143 = vmatprep.subr.mxu0 0.0
    %1144 = vmatpush1.msra.mxu0 0.0
    %1145 = vmatprep.subr.mxu0 0.0
    %1146 = vmatpush1.msra.mxu0 0.0
    %1147 = vmatprep.subr.mxu0 0.0
    %1148 = vmatpush1.msra.mxu0 0.0
    %1149 = vmatprep.subr.mxu0 0.0
    %1150 = vmatpush1.msra.mxu0 0.0
    %1151 = vmatprep.subr.mxu0 0.0
    %1152 = vmatpush1.msra.mxu0 0.0
    %1153 = vmatprep.subr.mxu0 0.0
    %1154 = vmatpush1.msra.mxu0 0.0
    %1155 = vmatprep.subr.mxu0 0.0
    %1156 = vmatpush1.msra.mxu0 0.0
    %1157 = vmatprep.subr.mxu0 0.0
    %1158 = vmatpush1.msra.mxu0 0.0
    %1159 = vmatprep.subr.mxu0 0.0
    %1160 = vmatpush1.msra.mxu0 0.0
    %1161 = vmatprep.subr.mxu0 0.0
    %1162 = vmatpush1.msra.mxu0 0.0
    %1163 = vmatprep.subr.mxu0 0.0
    %1164 = vmatpush1.msra.mxu0 0.0
    %1165 = vmatprep.subr.mxu0 0.0
    %1166 = vmatpush1.msra.mxu0 0.0
    %1167 = vmatprep.subr.mxu0 0.0
    %1168 = vmatpush1.msra.mxu0 0.0
    %1169 = vmatprep.subr.mxu0 0.0
    %1170 = vmatpush1.msra.mxu0 0.0
    %1171 = vmatprep.mubr.f32.mxu0 0.0
    %1172 = vmatmul.mubr.f32.gmra.mrb[0].mxu0 %v1105
    %v1173 = vpop.f32.mrb[0].mxu0
    %v1174 = vadd.f32 0.0, %v1173
    %v1175 = vpop.f32.mrb[0].mxu0
    %1176 = vdwg.mxu0
    %v1177 = vadd.f32 %v1015, %v1174
    %v1178 = vld [vmem:[#allocation2 + $0x7] sm:$0x1]
    %v1179 = vld [vmem:[#allocation2 + $0xf] sm:$0x1]
    %v1180 = vld [vmem:[#allocation2 + $0x17] sm:$0x1]
    %v1181 = vld [vmem:[#allocation2 + $0x1f] sm:$0x1]
    %v1186 = vrot.slane %v1179, 7
    %v1187 = vsel %vm51, %v1186, %v1178
    %v1188 = vrot.slane %v1180, 6
    %v1189 = vsel %vm54, %v1188, %v1187
    %v1190 = vrot.slane %v1181, 5
    %v1191 = vsel %vm57, %v1190, %v1189
    %v1192 = vsel %vm59, %v1191, 0
    %1194 = vmatprep.subr.mxu0 0.0
    %1195 = vmatpush1.msra.mxu0 %v34
    %1196 = vmatprep.subr.mxu0 0.0
    %1197 = vmatpush1.msra.mxu0 %v35
    %1198 = vmatprep.subr.mxu0 0.0
    %1199 = vmatpush1.msra.mxu0 %v36
    %1200 = vmatprep.subr.mxu0 0.0
    %1201 = vmatpush1.msra.mxu0 %v37
    %1202 = vmatprep.subr.mxu0 0.0
    %1203 = vmatpush1.msra.mxu0 %v38
    %1204 = vmatprep.subr.mxu0 0.0
    %1205 = vmatpush1.msra.mxu0 %v39
    %1206 = vmatprep.subr.mxu0 0.0
    %1207 = vmatpush1.msra.mxu0 %v40
    %1208 = vmatprep.subr.mxu0 0.0
    %1209 = vmatpush1.msra.mxu0 %v41
    %1210 = vmatprep.subr.mxu0 0.0
    %1211 = vmatpush1.msra.mxu0 0.0
    %1212 = vmatprep.subr.mxu0 0.0
    %1213 = vmatpush1.msra.mxu0 0.0
    %1214 = vmatprep.subr.mxu0 0.0
    %1215 = vmatpush1.msra.mxu0 0.0
    %1216 = vmatprep.subr.mxu0 0.0
    %1217 = vmatpush1.msra.mxu0 0.0
    %1218 = vmatprep.subr.mxu0 0.0
    %1219 = vmatpush1.msra.mxu0 0.0
    %1220 = vmatprep.subr.mxu0 0.0
    %1221 = vmatpush1.msra.mxu0 0.0
    %1222 = vmatprep.subr.mxu0 0.0
    %1223 = vmatpush1.msra.mxu0 0.0
    %1224 = vmatprep.subr.mxu0 0.0
    %1225 = vmatpush1.msra.mxu0 0.0
    %1226 = vmatprep.subr.mxu0 0.0
    %1227 = vmatpush1.msra.mxu0 0.0
    %1228 = vmatprep.subr.mxu0 0.0
    %1229 = vmatpush1.msra.mxu0 0.0
    %1230 = vmatprep.subr.mxu0 0.0
    %1231 = vmatpush1.msra.mxu0 0.0
    %1232 = vmatprep.subr.mxu0 0.0
    %1233 = vmatpush1.msra.mxu0 0.0
    %1234 = vmatprep.subr.mxu0 0.0
    %1235 = vmatpush1.msra.mxu0 0.0
    %1236 = vmatprep.subr.mxu0 0.0
    %1237 = vmatpush1.msra.mxu0 0.0
    %1238 = vmatprep.subr.mxu0 0.0
    %1239 = vmatpush1.msra.mxu0 0.0
    %1240 = vmatprep.subr.mxu0 0.0
    %1241 = vmatpush1.msra.mxu0 0.0
    %1242 = vmatprep.subr.mxu0 0.0
    %1243 = vmatpush1.msra.mxu0 0.0
    %1244 = vmatprep.subr.mxu0 0.0
    %1245 = vmatpush1.msra.mxu0 0.0
    %1246 = vmatprep.subr.mxu0 0.0
    %1247 = vmatpush1.msra.mxu0 0.0
    %1248 = vmatprep.subr.mxu0 0.0
    %1249 = vmatpush1.msra.mxu0 0.0
    %1250 = vmatprep.subr.mxu0 0.0
    %1251 = vmatpush1.msra.mxu0 0.0
    %1252 = vmatprep.subr.mxu0 0.0
    %1253 = vmatpush1.msra.mxu0 0.0
    %1254 = vmatprep.subr.mxu0 0.0
    %1255 = vmatpush1.msra.mxu0 0.0
    %1256 = vmatprep.subr.mxu0 0.0
    %1257 = vmatpush1.msra.mxu0 0.0
    %1258 = vmatprep.mubr.f32.mxu0 0.0
    %1259 = vmatmul.mubr.f32.gmra.mrb[0].mxu0 %v1192
    %v1260 = vpop.f32.mrb[0].mxu0
    %v1261 = vadd.f32 0.0, %v1260
    %v1262 = vpop.f32.mrb[0].mxu0
    %1263 = vdwg.mxu0
    %s1264 = scalar_lea.vmem %s2, 56
    %v1265 = vld [vmem:[%s1264] sm:$0xff]
    %v1267 = vsel %vm221, %v1261, 0
    %1269 = vmatprep.subr.mxu0 0.0
    %1270 = vmatpush1.msra.mxu0 %v1265
    %1271 = vmatprep.subr.mxu0 0.0
    %1272 = vmatpush1.msra.mxu0 0.0
    %1273 = vmatprep.subr.mxu0 0.0
    %1274 = vmatpush1.msra.mxu0 0.0
    %1275 = vmatprep.subr.mxu0 0.0
    %1276 = vmatpush1.msra.mxu0 0.0
    %1277 = vmatprep.subr.mxu0 0.0
    %1278 = vmatpush1.msra.mxu0 0.0
    %1279 = vmatprep.subr.mxu0 0.0
    %1280 = vmatpush1.msra.mxu0 0.0
    %1281 = vmatprep.subr.mxu0 0.0
    %1282 = vmatpush1.msra.mxu0 0.0
    %1283 = vmatprep.subr.mxu0 0.0
    %1284 = vmatpush1.msra.mxu0 0.0
    %1285 = vmatprep.subr.mxu0 0.0
    %1286 = vmatpush1.msra.mxu0 0.0
    %1287 = vmatprep.subr.mxu0 0.0
    %1288 = vmatpush1.msra.mxu0 0.0
    %1289 = vmatprep.subr.mxu0 0.0
    %1290 = vmatpush1.msra.mxu0 0.0
    %1291 = vmatprep.subr.mxu0 0.0
    %1292 = vmatpush1.msra.mxu0 0.0
    %1293 = vmatprep.subr.mxu0 0.0
    %1294 = vmatpush1.msra.mxu0 0.0
    %1295 = vmatprep.subr.mxu0 0.0
    %1296 = vmatpush1.msra.mxu0 0.0
    %1297 = vmatprep.subr.mxu0 0.0
    %1298 = vmatpush1.msra.mxu0 0.0
    %1299 = vmatprep.subr.mxu0 0.0
    %1300 = vmatpush1.msra.mxu0 0.0
    %1301 = vmatprep.subr.mxu0 0.0
    %1302 = vmatpush1.msra.mxu0 0.0
    %1303 = vmatprep.subr.mxu0 0.0
    %1304 = vmatpush1.msra.mxu0 0.0
    %1305 = vmatprep.subr.mxu0 0.0
    %1306 = vmatpush1.msra.mxu0 0.0
    %1307 = vmatprep.subr.mxu0 0.0
    %1308 = vmatpush1.msra.mxu0 0.0
    %1309 = vmatprep.subr.mxu0 0.0
    %1310 = vmatpush1.msra.mxu0 0.0
    %1311 = vmatprep.subr.mxu0 0.0
    %1312 = vmatpush1.msra.mxu0 0.0
    %1313 = vmatprep.subr.mxu0 0.0
    %1314 = vmatpush1.msra.mxu0 0.0
    %1315 = vmatprep.subr.mxu0 0.0
    %1316 = vmatpush1.msra.mxu0 0.0
    %1317 = vmatprep.subr.mxu0 0.0
    %1318 = vmatpush1.msra.mxu0 0.0
    %1319 = vmatprep.subr.mxu0 0.0
    %1320 = vmatpush1.msra.mxu0 0.0
    %1321 = vmatprep.subr.mxu0 0.0
    %1322 = vmatpush1.msra.mxu0 0.0
    %1323 = vmatprep.subr.mxu0 0.0
    %1324 = vmatpush1.msra.mxu0 0.0
    %1325 = vmatprep.subr.mxu0 0.0
    %1326 = vmatpush1.msra.mxu0 0.0
    %1327 = vmatprep.subr.mxu0 0.0
    %1328 = vmatpush1.msra.mxu0 0.0
    %1329 = vmatprep.subr.mxu0 0.0
    %1330 = vmatpush1.msra.mxu0 0.0
    %1331 = vmatprep.subr.mxu0 0.0
    %1332 = vmatpush1.msra.mxu0 0.0
    %1333 = vmatprep.mubr.f32.mxu0 0.0
    %1334 = vmatmul.mubr.f32.gmra.mrb[0].mxu0 %v1267
    %v1335 = vpop.f32.mrb[0].mxu0
    %v1336 = vadd.f32 0.0, %v1335
    %v1337 = vpop.f32.mrb[0].mxu0
    %1338 = vdwg.mxu0
    %v1339 = vadd.f32 %v1177, %v1336
    %v1340 = vld [vmem:[#allocation5] sm:$0xf]
    %v1341 = vadd.f32 %v1340, %v1339
    %1342 = vst [vmem:[#allocation5] sm:$0xf] %v1341
    // Predicated region
    $region22: #{tpu_custom_call.1} parent=1 // pred_check
      _
    $region23: #{tpu_custom_call.1} parent=1 // pred_check_branch
      %1344 = sbr.rel (0) target = $region25
    $region24: #{tpu_custom_call.1} parent=1 // pred_region
      %s1346 = ssub.s32 64, 64
      %1347 = vsyncadd [#allocation4], %s1346
      %s1349 = sshll.u32 [#allocation5], 4
      %s1350 = int_to_ptr.vmem [resolvable:$true] %s1349
      %1352 = dma.vmem_to_hbm [thread:$0]  %s1350, 64, %s3, [#allocation4]
    $region25: #{tpu_custom_call.1} parent=1 // pred_fallthru
      _
    // Predicated region
    $region26: #{tpu_custom_call.1} parent=1 // pred_check
      _
    $region27: #{tpu_custom_call.1} parent=1 // pred_check_branch
      %1354 = sbr.rel (0) target = $region29
    $region28: #{tpu_custom_call.1} parent=1 // pred_region
      %1355 = dma.done [#allocation4], 64
    $region29: #{tpu_custom_call.1} parent=1 // pred_fallthru
      _
    %1356 = vsyncpa [#allocation3], 1
    %1357 = vsyncpa [#allocation4], 1

</llo_original>
